<compile_context>
chip_gen: v5e
topology: v5e:2x2
jax: 0.10.0
libtpu: 0.0.40
codegen_flags: <defaults>
</compile_context>

<pallas_src>
import functools
import math

import jax
import jax.numpy as jnp
from jax.experimental import pallas as pl
from jax.experimental.pallas import tpu as pltpu

d_model = 284
d_ff = d_model * 4  # 1136


def _default_gelu_dtype():
    """bf16 GELU on chips with a bf16 VPU/EUP (v6e, v7x); f32 otherwise."""
    try:
        kind = jax.devices()[0].device_kind.lower()
    except Exception:  # pragma: no cover - defensive
        return jnp.float32
    if ("v6" in kind) or ("v7" in kind) or ("7x" in kind):
        return jnp.bfloat16
    return jnp.float32


def _gelu_erf(a_f32, compute_dtype):
    """gelu(a) = a * 0.5 * (1 + erf(a/sqrt(2))), erf via A&S 7.1.26.

    The reciprocal runs in f32 on the EUP (approx=True); the heavy
    polynomial / exp part runs in `compute_dtype` (bf16 on v6e/v7x).
    """
    z = a_f32 * jnp.float32(1.0 / math.sqrt(2.0))
    az = jnp.abs(z)
    # 1 / (1 + p*|z|) on the EUP (free slot relative to the VALU).
    t32 = pl.reciprocal(jnp.float32(1.0) + jnp.float32(0.3275911) * az,
                        approx=True)
    t = t32.astype(compute_dtype)
    azc = az.astype(compute_dtype)
    poly = t * (0.254829592
         + t * (-0.284496736
         + t * (1.421413741
         + t * (-1.453152027
         + t * 1.061405429))))
    erf_abs = 1.0 - poly * jnp.exp(-azc * azc)
    erf_z = jnp.where(z < 0.0, -erf_abs, erf_abs)
    ac = a_f32.astype(compute_dtype)
    return ac * 0.5 * (1.0 + erf_z)


def _ffn_kernel(x_ref, w1_ref, b1_ref, w2_ref, b2_ref, out_ref, *, gelu_dtype):
    # x_ref: (tm, d_model) bf16 row tile; W1/W2 bf16 (resident); biases f32.
    a = jnp.dot(x_ref[...], w1_ref[...],
                preferred_element_type=jnp.float32) + b1_ref[...]
    g = _gelu_erf(a, gelu_dtype)
    c = jnp.dot(g.astype(jnp.bfloat16), w2_ref[...],
                preferred_element_type=jnp.float32) + b2_ref[...]
    out_ref[...] = c


def prepare_params(params):
    """One-time cast/reshape of the fc1/fc2 params (do this at model load)."""
    w1, b1, w2, b2 = params
    return (w1.astype(jnp.bfloat16),
            b1.reshape(1, d_ff).astype(jnp.float32),
            w2.astype(jnp.bfloat16),
            b2.reshape(1, d_model).astype(jnp.float32))


def poswise_ffn(x, prepared_params, *, tm=None, gelu_dtype=None):
    """x: (B, S, d_model) float32. Returns (B, S, d_model) float32."""
    w1b, b1r, w2b, b2r = prepared_params
    B, S, D = x.shape
    assert D == d_model
    M = B * S
    # Cast x to bf16 here (the MXU would truncate it anyway): halves x DMA and
    # removes a per-tile VALU repack inside the kernel.
    x2 = x.reshape(M, D).astype(jnp.bfloat16)

    if tm is None:
        if M >= 2048:
            tm = 512          # amortize ~0.35 us/step, keep MXU fed
        elif M >= 256:
            tm = 128
        else:
            # small problems: >= 2 grid steps (v7x has 2 TensorCores), row
            # tile a multiple of 8 (sublane granularity).
            tm = max(8, ((((M + 1) // 2) + 7) // 8) * 8)
    n_tiles = pl.cdiv(M, tm)  # no wrapper-side pad; Pallas handles edge blocks

    if gelu_dtype is None:
        gelu_dtype = _default_gelu_dtype()

    kernel = functools.partial(_ffn_kernel, gelu_dtype=gelu_dtype)

    out = pl.pallas_call(
        kernel,
        out_shape=jax.ShapeDtypeStruct((M, d_model), jnp.float32),
        grid=(n_tiles,),
        in_specs=[
            pl.BlockSpec((tm, d_model), lambda i: (i, 0)),      # x row tile (bf16)
            pl.BlockSpec((d_model, d_ff), lambda i: (0, 0)),    # W1 (resident, bf16)
            pl.BlockSpec((1, d_ff), lambda i: (0, 0)),          # b1 (f32)
            pl.BlockSpec((d_ff, d_model), lambda i: (0, 0)),    # W2 (resident, bf16)
            pl.BlockSpec((1, d_model), lambda i: (0, 0)),       # b2 (f32)
        ],
        out_specs=pl.BlockSpec((tm, d_model), lambda i: (i, 0)),
        compiler_params=pltpu.CompilerParams(
            dimension_semantics=("parallel",)),
    )(x2, w1b, b1r, w2b, b2r)

    return out.reshape(B, S, d_model)


def init_params(key):
    """Weights stored as (in, out) — i.e. transposed PyTorch nn.Linear weights."""
    ks = jax.random.split(key, 4)
    scale = 0.02
    w1 = scale * jax.random.normal(ks[0], (d_model, d_ff), jnp.float32)
    b1 = scale * jax.random.normal(ks[1], (d_ff,), jnp.float32)
    w2 = scale * jax.random.normal(ks[2], (d_ff, d_model), jnp.float32)
    b2 = scale * jax.random.normal(ks[3], (d_model,), jnp.float32)
    return (w1, b1, w2, b2)


def reference(x, params):
    """Pure-JAX f32 reference mirroring the PyTorch forward."""
    w1, b1, w2, b2 = params
    a = x @ w1 + b1
    g = a * 0.5 * (1.0 + jax.scipy.special.erf(a / math.sqrt(2.0)))
    return g @ w2 + b2


if __name__ == "__main__":
    B, S = 2, 8
    key = jax.random.PRNGKey(0)
    kx, kp = jax.random.split(key)

    x = jax.random.normal(kx, (B, S, d_model), jnp.float32)
    params = init_params(kp)
    prepared = prepare_params(params)   # one-time bf16 weight cast

    out = poswise_ffn(x, prepared)
    out = jax.block_until_ready(out)

    out_ref = reference(x, params)
    assert out.shape == (B, S, d_model)
    max_err = float(jnp.max(jnp.abs(out - out_ref)))
    assert jnp.allclose(out, out_ref, rtol=1e-2, atol=1e-2), max_err

    print("KERNEL_OK")
</pallas_src>

<mosaic_0001>
module attributes {stable_mosaic.version = 11 : i64} {
  func.func @_ffn_kernel(%arg0: i32, %arg1: memref<8x284xbf16, #tpu.memory_space<vmem>>, %arg2: memref<284x1136xbf16, #tpu.memory_space<vmem>>, %arg3: memref<1x1136xf32, #tpu.memory_space<vmem>>, %arg4: memref<1136x284xbf16, #tpu.memory_space<vmem>>, %arg5: memref<1x284xf32, #tpu.memory_space<vmem>>, %arg6: memref<8x284xf32, #tpu.memory_space<vmem>>) attributes {dimension_semantics = [#tpu.dimension_semantics<parallel>], iteration_bounds = array<i64: 2>, scalar_prefetch = 0 : i64, scratch_operands = 0 : i64, tpu.core_type = #tpu.core_type<tc>, window_params = [{transform_indices = @transform_0, window_bounds = array<i64: 8, 284>}, {pipeline_mode = #tpu.pipeline_mode<synchronous>, transform_indices = @transform_1, window_bounds = array<i64: 284, 1136>}, {pipeline_mode = #tpu.pipeline_mode<synchronous>, transform_indices = @transform_2, window_bounds = array<i64: 1, 1136>}, {pipeline_mode = #tpu.pipeline_mode<synchronous>, transform_indices = @transform_3, window_bounds = array<i64: 1136, 284>}, {pipeline_mode = #tpu.pipeline_mode<synchronous>, transform_indices = @transform_4, window_bounds = array<i64: 1, 284>}, {transform_indices = @transform_5, window_bounds = array<i64: 8, 284>}]} {
    %c0 = arith.constant 0 : index
    %c0_0 = arith.constant 0 : index
    %0 = vector.load %arg1[%c0, %c0_0] : memref<8x284xbf16, #tpu.memory_space<vmem>>, vector<8x284xbf16>
    %c0_1 = arith.constant 0 : index
    %c0_2 = arith.constant 0 : index
    %1 = vector.load %arg2[%c0_1, %c0_2] : memref<284x1136xbf16, #tpu.memory_space<vmem>>, vector<284x1136xbf16>
    %cst = arith.constant dense<0.000000e+00> : vector<8x1136xf32>
    %2 = tpu.matmul %0, %1, %cst {dimension_numbers = #tpu.dot_dimension_numbers<[1], [0], [0], [1], [0, 0, 1, 1], [], []>} : vector<8x284xbf16>, vector<284x1136xbf16>, vector<8x1136xf32> -> vector<8x1136xf32>
    %c0_3 = arith.constant 0 : index
    %c0_4 = arith.constant 0 : index
    %3 = vector.load %arg3[%c0_3, %c0_4] : memref<1x1136xf32, #tpu.memory_space<vmem>>, vector<1x1136xf32>
    %4 = vector.broadcast %3 : vector<1x1136xf32> to vector<8x1136xf32>
    %5 = arith.addf %2, %4 : vector<8x1136xf32>
    %cst_5 = arith.constant 0.707106769 : f32
    %6 = vector.broadcast %cst_5 : f32 to vector<8x1136xf32>
    %7 = arith.mulf %5, %6 : vector<8x1136xf32>
    %8 = math.absf %7 : vector<8x1136xf32>
    %cst_6 = arith.constant 0.327591091 : f32
    %9 = vector.broadcast %cst_6 : f32 to vector<8x1136xf32>
    %10 = arith.mulf %9, %8 : vector<8x1136xf32>
    %cst_7 = arith.constant 1.000000e+00 : f32
    %11 = vector.broadcast %cst_7 : f32 to vector<8x1136xf32>
    %12 = arith.addf %11, %10 : vector<8x1136xf32>
    %13 = tpu.reciprocal %12 {approx = true} : vector<8x1136xf32> -> vector<8x1136xf32>
    %cst_8 = arith.constant 1.06140542 : f32
    %14 = vector.broadcast %cst_8 : f32 to vector<8x1136xf32>
    %15 = arith.mulf %13, %14 : vector<8x1136xf32>
    %cst_9 = arith.constant -1.45315206 : f32
    %16 = vector.broadcast %cst_9 : f32 to vector<8x1136xf32>
    %17 = arith.addf %16, %15 : vector<8x1136xf32>
    %18 = arith.mulf %13, %17 : vector<8x1136xf32>
    %cst_10 = arith.constant 1.42141378 : f32
    %19 = vector.broadcast %cst_10 : f32 to vector<8x1136xf32>
    %20 = arith.addf %19, %18 : vector<8x1136xf32>
    %21 = arith.mulf %13, %20 : vector<8x1136xf32>
    %cst_11 = arith.constant -0.284496725 : f32
    %22 = vector.broadcast %cst_11 : f32 to vector<8x1136xf32>
    %23 = arith.addf %22, %21 : vector<8x1136xf32>
    %24 = arith.mulf %13, %23 : vector<8x1136xf32>
    %cst_12 = arith.constant 0.254829586 : f32
    %25 = vector.broadcast %cst_12 : f32 to vector<8x1136xf32>
    %26 = arith.addf %25, %24 : vector<8x1136xf32>
    %27 = arith.mulf %13, %26 : vector<8x1136xf32>
    %cst_13 = arith.constant 0.000000e+00 : f32
    %28 = vector.broadcast %cst_13 : f32 to vector<8x1136xf32>
    %29 = arith.subf %28, %8 : vector<8x1136xf32>
    %30 = arith.mulf %29, %8 : vector<8x1136xf32>
    %31 = math.exp %30 : vector<8x1136xf32>
    %32 = arith.mulf %27, %31 : vector<8x1136xf32>
    %cst_14 = arith.constant 1.000000e+00 : f32
    %33 = vector.broadcast %cst_14 : f32 to vector<8x1136xf32>
    %34 = arith.subf %33, %32 : vector<8x1136xf32>
    %cst_15 = arith.constant 0.000000e+00 : f32
    %35 = vector.broadcast %cst_15 : f32 to vector<8x1136xf32>
    %36 = arith.cmpf olt, %7, %35 : vector<8x1136xf32>
    %cst_16 = arith.constant 0.000000e+00 : f32
    %37 = vector.broadcast %cst_16 : f32 to vector<8x1136xf32>
    %38 = arith.subf %37, %34 : vector<8x1136xf32>
    %39 = arith.select %36, %38, %34 : vector<8x1136xi1>, vector<8x1136xf32>
    %cst_17 = arith.constant 5.000000e-01 : f32
    %40 = vector.broadcast %cst_17 : f32 to vector<8x1136xf32>
    %41 = arith.mulf %5, %40 : vector<8x1136xf32>
    %cst_18 = arith.constant 1.000000e+00 : f32
    %42 = vector.broadcast %cst_18 : f32 to vector<8x1136xf32>
    %43 = arith.addf %42, %39 : vector<8x1136xf32>
    %44 = arith.mulf %41, %43 : vector<8x1136xf32>
    %45 = arith.truncf %44 : vector<8x1136xf32> to vector<8x1136xbf16>
    %c0_19 = arith.constant 0 : index
    %c0_20 = arith.constant 0 : index
    %46 = vector.load %arg4[%c0_19, %c0_20] : memref<1136x284xbf16, #tpu.memory_space<vmem>>, vector<1136x284xbf16>
    %cst_21 = arith.constant dense<0.000000e+00> : vector<8x284xf32>
    %47 = tpu.matmul %45, %46, %cst_21 {dimension_numbers = #tpu.dot_dimension_numbers<[1], [0], [0], [1], [0, 0, 1, 1], [], []>} : vector<8x1136xbf16>, vector<1136x284xbf16>, vector<8x284xf32> -> vector<8x284xf32>
    %c0_22 = arith.constant 0 : index
    %c0_23 = arith.constant 0 : index
    %48 = vector.load %arg5[%c0_22, %c0_23] : memref<1x284xf32, #tpu.memory_space<vmem>>, vector<1x284xf32>
    %49 = vector.broadcast %48 : vector<1x284xf32> to vector<8x284xf32>
    %50 = arith.addf %47, %49 : vector<8x284xf32>
    %c0_24 = arith.constant 0 : index
    %c0_25 = arith.constant 0 : index
    %51 = vector.load %arg6[%c0_24, %c0_25] : memref<8x284xf32, #tpu.memory_space<vmem>>, vector<8x284xf32>
    tpu.vector_store %arg6[%c0_24, %c0_25], %50 {strides = array<i32>} : memref<8x284xf32, #tpu.memory_space<vmem>>, vector<8x284xf32>,
    return
  }
  func.func @transform_0(%arg0: i32) -> (i32, i32) {
    %c0_i32 = arith.constant 0 : i32
    %c0_i32_0 = arith.constant 0 : i32
    return %arg0, %c0_i32 : i32, i32
  }
  func.func @transform_1(%arg0: i32) -> (i32, i32) {
    %c0_i32 = arith.constant 0 : i32
    %c0_i32_0 = arith.constant 0 : i32
    %c0_i32_1 = arith.constant 0 : i32
    return %c0_i32, %c0_i32_0 : i32, i32
  }
  func.func @transform_2(%arg0: i32) -> (i32, i32) {
    %c0_i32 = arith.constant 0 : i32
    %c0_i32_0 = arith.constant 0 : i32
    %c0_i32_1 = arith.constant 0 : i32
    return %c0_i32, %c0_i32_0 : i32, i32
  }
  func.func @transform_3(%arg0: i32) -> (i32, i32) {
    %c0_i32 = arith.constant 0 : i32
    %c0_i32_0 = arith.constant 0 : i32
    %c0_i32_1 = arith.constant 0 : i32
    return %c0_i32, %c0_i32_0 : i32, i32
  }
  func.func @transform_4(%arg0: i32) -> (i32, i32) {
    %c0_i32 = arith.constant 0 : i32
    %c0_i32_0 = arith.constant 0 : i32
    %c0_i32_1 = arith.constant 0 : i32
    return %c0_i32, %c0_i32_0 : i32, i32
  }
  func.func @transform_5(%arg0: i32) -> (i32, i32) {
    %c0_i32 = arith.constant 0 : i32
    %c0_i32_0 = arith.constant 0 : i32
    return %arg0, %c0_i32 : i32, i32
  }
}

</mosaic_0001>

<llo_original>
// kernel: tpu_custom_call.1
$region0: #{tpu_custom_call.1}
  #allocation0 [shape = 'u32[]', space=smem, size = 0x4, offset = 0x4, fixed_abs, tag = 'smem constant byte address 0x4 - core index']
  #allocation1 [shape = 'u32[72,128]{1,0:T(1,128)}', space=vmem, size = 0x9000, scoped, tag = 'internal scratch']
  %s0 = inlined_call_operand.vmem [shape: bf16[16,284], index: 0, kind: input, shape index: {}]
  %s1 = inlined_call_operand.vmem [shape: bf16[284,1136], index: 1, kind: input, shape index: {}]
  %s2 = inlined_call_operand.vmem [shape: f32[1,1136], index: 2, kind: input, shape index: {}]
  %s3 = inlined_call_operand.vmem [shape: bf16[1136,284], index: 3, kind: input, shape index: {}]
  %s4 = inlined_call_operand.vmem [shape: f32[1,284], index: 4, kind: input, shape index: {}]
  %s5 = inlined_call_operand.hbm [shape: f32[16,284], index: 5, kind: output, shape index: {}]
  %s6 = sld [smem:[#allocation0]]
  $region53: #{tpu_custom_call.1} parent=0
    _
  %s8 = ssub.s32 1, %s6
  %s9 = scalar_select 0, %s8, %s6
  $region1: #{tpu_custom_call.1} parent=0
    #allocation2 [shape = 'u8[24576]{0}', space=vmem, size = 0x6000, scoped, tag = 'output window, operand 0']
    #allocation3 [shape = 's32[2]{0}', space=sflag, size = 0x8, scoped, tag = 'scoped memory for tpu_custom_call.1']
    %10 = vsyncpa [#allocation3], 0
    %s11 = scalar_lea.sflag [#allocation3], 1
    %12 = vsyncpa %s11, 0
    loop: start=0, step=1, limit=4
    $region2: #{tpu_custom_call.1} parent=1 // loop_pre_header
      _
    $region3: #{tpu_custom_call.1} parent=1 // loop_header
      %s14 = sphi 0, %s18
      %p15 = scmp.ge.s32.totalorder %s14, 4
      %s24 = sphi 0, %s26
      %s27 = sphi 0, %s24
      %s28 = sphi 0, %s27
      %s44 = sphi 0, %s28
      %s48 = sphi 0, %s48
      %s50 = sphi 0, %s48
      %s51 = sphi 0, %s50
      %s65 = sphi 0, %s51
      %s69 = sphi 0, %s69
      %s71 = sphi 0, %s69
      %s72 = sphi 0, %s71
      %s86 = sphi 0, %s72
      %s90 = sphi 0, %s90
      %s92 = sphi 0, %s90
      %s93 = sphi 0, %s92
      %s107 = sphi 0, %s93
      %s111 = sphi 0, %s111
      %s113 = sphi 0, %s111
      %s114 = sphi 0, %s113
      %s128 = sphi 0, %s114
      %s134 = sphi 0, %s136
      %s137 = sphi 0, %s134
      %s138 = sphi 0, %s137
      %s154 = sphi 0, %s138
    $region4: #{tpu_custom_call.1} parent=1 // loop_header_branch
      %17 = sbr.rel (%p15) target = $region8
    $region5: #{tpu_custom_call.1} parent=1 // loop_body
      %s19 = ssub.s32 %s14, 1
      %s20 = ssub.s32 %s14, 2
      %s21 = sadd.s32 %s14, 1
      %s22 = ssub.s32 %s14, %s21
      %p23 = scmp.eq.s32.totalorder %s22, 0
      %s25 = sadd.s32 %s24, 1
      %s26 = scalar_select %p23, %s24, %s25
      %p29 = pneg %p23
      %p30 = scmp.eq.s32.totalorder %s14, 1
      %p31 = por %p29, %p30
      %p32 = scmp.ne.s32.totalorder %s24, %s27
      %p33 = scmp.eq.s32.totalorder %s14, 0
      %p34 = por %p32, %p33
      %p35 = scmp.ne.s32.totalorder %s24, %s27
      %p36 = scmp.eq.s32.totalorder %s19, 1
      %p37 = por %p35, %p36
      %p38 = scmp.ne.s32.totalorder %s27, %s28
      %p39 = scmp.eq.s32.totalorder %s19, 0
      %p40 = por %p38, %p39
      %p41 = scmp.ne.s32.totalorder %s27, %s28
      %p42 = scmp.eq.s32.totalorder %s20, 1
      %p43 = por %p41, %p42
      %p45 = scmp.ne.s32.totalorder %s28, %s44
      %p46 = scmp.eq.s32.totalorder %s20, 0
      %p47 = por %p45, %p46
      %s49 = sadd.s32 %s48, 1
      %p52 = scmp.eq.s32.totalorder %s14, 1
      %p53 = scmp.ne.s32.totalorder %s48, %s50
      %p54 = scmp.eq.s32.totalorder %s14, 0
      %p55 = por %p53, %p54
      %p56 = scmp.ne.s32.totalorder %s48, %s50
      %p57 = scmp.eq.s32.totalorder %s19, 1
      %p58 = por %p56, %p57
      %p59 = scmp.ne.s32.totalorder %s50, %s51
      %p60 = scmp.eq.s32.totalorder %s19, 0
      %p61 = por %p59, %p60
      %p62 = scmp.ne.s32.totalorder %s50, %s51
      %p63 = scmp.eq.s32.totalorder %s20, 1
      %p64 = por %p62, %p63
      %p66 = scmp.ne.s32.totalorder %s51, %s65
      %p67 = scmp.eq.s32.totalorder %s20, 0
      %p68 = por %p66, %p67
      %s70 = sadd.s32 %s69, 1
      %p73 = scmp.eq.s32.totalorder %s14, 1
      %p74 = scmp.ne.s32.totalorder %s69, %s71
      %p75 = scmp.eq.s32.totalorder %s14, 0
      %p76 = por %p74, %p75
      %p77 = scmp.ne.s32.totalorder %s69, %s71
      %p78 = scmp.eq.s32.totalorder %s19, 1
      %p79 = por %p77, %p78
      %p80 = scmp.ne.s32.totalorder %s71, %s72
      %p81 = scmp.eq.s32.totalorder %s19, 0
      %p82 = por %p80, %p81
      %p83 = scmp.ne.s32.totalorder %s71, %s72
      %p84 = scmp.eq.s32.totalorder %s20, 1
      %p85 = por %p83, %p84
      %p87 = scmp.ne.s32.totalorder %s72, %s86
      %p88 = scmp.eq.s32.totalorder %s20, 0
      %p89 = por %p87, %p88
      %s91 = sadd.s32 %s90, 1
      %p94 = scmp.eq.s32.totalorder %s14, 1
      %p95 = scmp.ne.s32.totalorder %s90, %s92
      %p96 = scmp.eq.s32.totalorder %s14, 0
      %p97 = por %p95, %p96
      %p98 = scmp.ne.s32.totalorder %s90, %s92
      %p99 = scmp.eq.s32.totalorder %s19, 1
      %p100 = por %p98, %p99
      %p101 = scmp.ne.s32.totalorder %s92, %s93
      %p102 = scmp.eq.s32.totalorder %s19, 0
      %p103 = por %p101, %p102
      %p104 = scmp.ne.s32.totalorder %s92, %s93
      %p105 = scmp.eq.s32.totalorder %s20, 1
      %p106 = por %p104, %p105
      %p108 = scmp.ne.s32.totalorder %s93, %s107
      %p109 = scmp.eq.s32.totalorder %s20, 0
      %p110 = por %p108, %p109
      %s112 = sadd.s32 %s111, 1
      %p115 = scmp.eq.s32.totalorder %s14, 1
      %p116 = scmp.ne.s32.totalorder %s111, %s113
      %p117 = scmp.eq.s32.totalorder %s14, 0
      %p118 = por %p116, %p117
      %p119 = scmp.ne.s32.totalorder %s111, %s113
      %p120 = scmp.eq.s32.totalorder %s19, 1
      %p121 = por %p119, %p120
      %p122 = scmp.ne.s32.totalorder %s113, %s114
      %p123 = scmp.eq.s32.totalorder %s19, 0
      %p124 = por %p122, %p123
      %p125 = scmp.ne.s32.totalorder %s113, %s114
      %p126 = scmp.eq.s32.totalorder %s20, 1
      %p127 = por %p125, %p126
      %p129 = scmp.ne.s32.totalorder %s114, %s128
      %p130 = scmp.eq.s32.totalorder %s20, 0
      %p131 = por %p129, %p130
      %s132 = ssub.s32 %s14, %s21
      %p133 = scmp.eq.s32.totalorder %s132, 0
      %s135 = sadd.s32 %s134, 1
      %s136 = scalar_select %p133, %s134, %s135
      %p139 = pneg %p133
      %p140 = scmp.eq.s32.totalorder %s14, 1
      %p141 = por %p139, %p140
      %p142 = scmp.ne.s32.totalorder %s134, %s137
      %p143 = scmp.eq.s32.totalorder %s14, 0
      %p144 = por %p142, %p143
      %p145 = scmp.ne.s32.totalorder %s134, %s137
      %p146 = scmp.eq.s32.totalorder %s19, 1
      %p147 = por %p145, %p146
      %p148 = scmp.ne.s32.totalorder %s137, %s138
      %p149 = scmp.eq.s32.totalorder %s19, 0
      %p150 = por %p148, %p149
      %p151 = scmp.ne.s32.totalorder %s137, %s138
      %p152 = scmp.eq.s32.totalorder %s20, 1
      %p153 = por %p151, %p152
      %p155 = scmp.ne.s32.totalorder %s138, %s154
      %p156 = scmp.eq.s32.totalorder %s20, 0
      %p157 = por %p155, %p156
      %p158 = scmp.le.s32.totalorder 1, %s14
      %p159 = scmp.lt.s32.totalorder %s14, 3
      %p160 = pnand %p158, %p159
      %p161 = pneg %p160
      // Predicated region
      $region9: #{tpu_custom_call.1} parent=5 // pred_check
        _
      $region10: #{tpu_custom_call.1} parent=5 // pred_check_branch
        %163 = sbr.rel (%p160) target = $region12
      $region11: #{tpu_custom_call.1} parent=5 // pred_region
        %s164 = ssub.s32 %s14, 1
        // Predicated region
        $region13: #{tpu_custom_call.1} parent=11 // pred_check
          %p165 = pneg %p61
        $region14: #{tpu_custom_call.1} parent=11 // pred_check_branch
          %167 = sbr.rel (%p165) target = $region16
        $region15: #{tpu_custom_call.1} parent=11 // pred_region
          _
        $region16: #{tpu_custom_call.1} parent=11 // pred_fallthru
          _
        // Predicated region
        $region17: #{tpu_custom_call.1} parent=11 // pred_check
          %p168 = pneg %p82
        $region18: #{tpu_custom_call.1} parent=11 // pred_check_branch
          %170 = sbr.rel (%p168) target = $region20
        $region19: #{tpu_custom_call.1} parent=11 // pred_region
          _
        $region20: #{tpu_custom_call.1} parent=11 // pred_fallthru
          _
        // Predicated region
        $region21: #{tpu_custom_call.1} parent=11 // pred_check
          %p171 = pneg %p103
        $region22: #{tpu_custom_call.1} parent=11 // pred_check_branch
          %173 = sbr.rel (%p171) target = $region24
        $region23: #{tpu_custom_call.1} parent=11 // pred_region
          _
        $region24: #{tpu_custom_call.1} parent=11 // pred_fallthru
          _
        // Predicated region
        $region25: #{tpu_custom_call.1} parent=11 // pred_check
          %p174 = pneg %p124
        $region26: #{tpu_custom_call.1} parent=11 // pred_check_branch
          %176 = sbr.rel (%p174) target = $region28
        $region27: #{tpu_custom_call.1} parent=11 // pred_region
          _
        $region28: #{tpu_custom_call.1} parent=11 // pred_fallthru
          _
      $region12: #{tpu_custom_call.1} parent=5 // pred_fallthru
        _
      %p177 = scmp.lt.s32.totalorder %s14, 2
      // Predicated region
      $region29: #{tpu_custom_call.1} parent=5 // pred_check
        %p178 = pneg %p177
      $region30: #{tpu_custom_call.1} parent=5 // pred_check_branch
        %180 = sbr.rel (%p178) target = $region32
      $region31: #{tpu_custom_call.1} parent=5 // pred_region
        // Predicated region
        $region33: #{tpu_custom_call.1} parent=31 // pred_check
          %p181 = pneg %p34
        $region34: #{tpu_custom_call.1} parent=31 // pred_check_branch
          %183 = sbr.rel (%p181) target = $region36
        $region35: #{tpu_custom_call.1} parent=31 // pred_region
          %p184 = scmp.lt.s32.totalorder %s14, 1
          %s185 = scalar_select %p184, %s14, 1
          %s186 = smul.addr %s185, 3
          %s187 = smul.addr %s186, 4
          %s188 = scalar_lea.vmem %s0, %s187
        $region36: #{tpu_custom_call.1} parent=31 // pred_fallthru
          _
      $region32: #{tpu_custom_call.1} parent=5 // pred_fallthru
        _
      %p189 = scmp.le.s32.totalorder 1, %s14
      %p190 = scmp.lt.s32.totalorder %s14, 3
      %p191 = pnand %p189, %p190
      %p192 = pneg %p191
      // Predicated region
      $region37: #{tpu_custom_call.1} parent=5 // pred_check
        _
      $region38: #{tpu_custom_call.1} parent=5 // pred_check_branch
        %194 = sbr.rel (%p191) target = $region40
      $region39: #{tpu_custom_call.1} parent=5 // pred_region
        %s195 = ssub.s32 %s14, 1
        %p196 = scmp.lt.s32.totalorder %s19, 1
        %s197 = scalar_select %p196, %s19, 1
        %s198 = smul.addr %s197, 3
        %s199 = smul.addr %s198, 4
        %s200 = scalar_lea.vmem %s0, %s199
        %p201 = pneg %p40
        %p202 = pneg %p37
        %p203 = pneg %p61
        %p204 = pneg %p58
        %p205 = pneg %p82
        %p206 = pneg %p79
        %p207 = pneg %p103
        %p208 = pneg %p100
        %p209 = pneg %p124
        %p210 = pneg %p121
        %p211 = pneg %p150
        %p212 = pneg %p147
        %s213 = sand.u32 %s137, 1
        %s214 = scalar_lea.sflag [#allocation3], %s213
        %s215 = sand.u32 %s137, 1
        %s216 = smul.addr %s215, 24
        %s217 = scalar_lea.vmem [#allocation2], %s216
        %p218 = scmp.lt.s32.totalorder %s19, 1
        %s219 = scalar_select %p218, %s19, 1
        %s220 = smul.addr %s219, 3
        %s221 = smul.addr %s220, 4
        %s222 = scalar_lea.vmem %s0, %s221
        %v224 = vld [vmem:[%s222] sm:$0xff]
        %v225 = vld [vmem:[%s222 + $0x8] sm:$0xf]
        %v226 = vld [vmem:[%s1] sm:$0xff]
        %v227 = vld [vmem:[%s1 + $0x8] sm:$0xff]
        %v228 = vld [vmem:[%s1 + $0x10] sm:$0xff]
        %v229 = vld [vmem:[%s1 + $0x18] sm:$0xff]
        %v230 = vld [vmem:[%s1 + $0x20] sm:$0xf]
        %v231 = vld [vmem:[%s1 + $0x24] sm:$0xff]
        %v232 = vld [vmem:[%s1 + $0x2c] sm:$0xff]
        %v233 = vld [vmem:[%s1 + $0x34] sm:$0xff]
        %v234 = vld [vmem:[%s1 + $0x3c] sm:$0xff]
        %v235 = vld [vmem:[%s1 + $0x44] sm:$0xf]
        %v236 = vld [vmem:[%s1 + $0x48] sm:$0xff]
        %v237 = vld [vmem:[%s1 + $0x50] sm:$0xff]
        %v238 = vld [vmem:[%s1 + $0x58] sm:$0xff]
        %v239 = vld [vmem:[%s1 + $0x60] sm:$0xff]
        %v240 = vld [vmem:[%s1 + $0x68] sm:$0xf]
        %v241 = vld [vmem:[%s1 + $0x6c] sm:$0xff]
        %v242 = vld [vmem:[%s1 + $0x74] sm:$0xff]
        %v243 = vld [vmem:[%s1 + $0x7c] sm:$0xff]
        %v244 = vld [vmem:[%s1 + $0x84] sm:$0xff]
        %v245 = vld [vmem:[%s1 + $0x8c] sm:$0xf]
        %v246 = vld [vmem:[%s1 + $0x90] sm:$0xff]
        %v247 = vld [vmem:[%s1 + $0x98] sm:$0xff]
        %v248 = vld [vmem:[%s1 + $0xa0] sm:$0xff]
        %v249 = vld [vmem:[%s1 + $0xa8] sm:$0xff]
        %v250 = vld [vmem:[%s1 + $0xb0] sm:$0xf]
        %v251 = vld [vmem:[%s1 + $0xb4] sm:$0xff]
        %v252 = vld [vmem:[%s1 + $0xbc] sm:$0xff]
        %v253 = vld [vmem:[%s1 + $0xc4] sm:$0xff]
        %v254 = vld [vmem:[%s1 + $0xcc] sm:$0xff]
        %v255 = vld [vmem:[%s1 + $0xd4] sm:$0xf]
        %v256 = vld [vmem:[%s1 + $0xd8] sm:$0xff]
        %v257 = vld [vmem:[%s1 + $0xe0] sm:$0xff]
        %v258 = vld [vmem:[%s1 + $0xe8] sm:$0xff]
        %v259 = vld [vmem:[%s1 + $0xf0] sm:$0xff]
        %v260 = vld [vmem:[%s1 + $0xf8] sm:$0xf]
        %v261 = vld [vmem:[%s1 + $0xfc] sm:$0xff]
        %v262 = vld [vmem:[%s1 + $0x104] sm:$0xff]
        %v263 = vld [vmem:[%s1 + $0x10c] sm:$0xff]
        %v264 = vld [vmem:[%s1 + $0x114] sm:$0xff]
        %v265 = vld [vmem:[%s1 + $0x11c] sm:$0xf]
        %v266 = vld [vmem:[%s1 + $0x120] sm:$0xff]
        %v267 = vld [vmem:[%s1 + $0x128] sm:$0xff]
        %v268 = vld [vmem:[%s1 + $0x130] sm:$0xff]
        %v269 = vld [vmem:[%s1 + $0x138] sm:$0xff]
        %v270 = vld [vmem:[%s1 + $0x140] sm:$0xf]
        %v271 = vld [vmem:[%s1 + $0x144] sm:$0xff]
        %v272 = vld [vmem:[%s1 + $0x14c] sm:$0xff]
        %v273 = vld [vmem:[%s1 + $0x154] sm:$0xff]
        %v274 = vld [vmem:[%s1 + $0x15c] sm:$0xff]
        %v275 = vld [vmem:[%s1 + $0x164] sm:$0xf]
        %v276 = vld [vmem:[%s1 + $0x168] sm:$0xff]
        %v277 = vld [vmem:[%s1 + $0x170] sm:$0xff]
        %v278 = vld [vmem:[%s1 + $0x178] sm:$0xff]
        %v279 = vld [vmem:[%s1 + $0x180] sm:$0xff]
        %v280 = vld [vmem:[%s1 + $0x188] sm:$0xf]
        %v281 = vld [vmem:[%s1 + $0x18c] sm:$0xff]
        %v282 = vld [vmem:[%s1 + $0x194] sm:$0xff]
        %v283 = vld [vmem:[%s1 + $0x19c] sm:$0xff]
        %v284 = vld [vmem:[%s1 + $0x1a4] sm:$0xff]
        %v285 = vld [vmem:[%s1 + $0x1ac] sm:$0xf]
        %v286 = vld [vmem:[%s1 + $0x1b0] sm:$0xff]
        %v287 = vld [vmem:[%s1 + $0x1b8] sm:$0xff]
        %v288 = vld [vmem:[%s1 + $0x1c0] sm:$0xff]
        %v289 = vld [vmem:[%s1 + $0x1c8] sm:$0xff]
        %v290 = vld [vmem:[%s1 + $0x1d0] sm:$0xf]
        %v291 = vld [vmem:[%s1 + $0x1d4] sm:$0xff]
        %v292 = vld [vmem:[%s1 + $0x1dc] sm:$0xff]
        %v293 = vld [vmem:[%s1 + $0x1e4] sm:$0xff]
        %v294 = vld [vmem:[%s1 + $0x1ec] sm:$0xff]
        %v295 = vld [vmem:[%s1 + $0x1f4] sm:$0xf]
        %v296 = vld [vmem:[%s1 + $0x1f8] sm:$0xff]
        %v297 = vld [vmem:[%s1 + $0x200] sm:$0xff]
        %v298 = vld [vmem:[%s1 + $0x208] sm:$0xff]
        %v299 = vld [vmem:[%s1 + $0x210] sm:$0xff]
        %v300 = vld [vmem:[%s1 + $0x218] sm:$0xf]
        %v301 = vld [vmem:[%s1 + $0x21c] sm:$0xff]
        %v302 = vld [vmem:[%s1 + $0x224] sm:$0xff]
        %v303 = vld [vmem:[%s1 + $0x22c] sm:$0xff]
        %v304 = vld [vmem:[%s1 + $0x234] sm:$0xff]
        %v305 = vld [vmem:[%s1 + $0x23c] sm:$0xf]
        %v306 = vld [vmem:[%s1 + $0x240] sm:$0xff]
        %v307 = vld [vmem:[%s1 + $0x248] sm:$0xff]
        %v308 = vld [vmem:[%s1 + $0x250] sm:$0xff]
        %v309 = vld [vmem:[%s1 + $0x258] sm:$0xff]
        %v310 = vld [vmem:[%s1 + $0x260] sm:$0xf]
        %v311 = vld [vmem:[%s1 + $0x264] sm:$0xff]
        %v312 = vld [vmem:[%s1 + $0x26c] sm:$0xff]
        %v313 = vld [vmem:[%s1 + $0x274] sm:$0xff]
        %v314 = vld [vmem:[%s1 + $0x27c] sm:$0xff]
        %v315 = vld [vmem:[%s1 + $0x284] sm:$0xf]
        %v316 = vld [vmem:[%s1 + $0x288] sm:$0xff]
        %v317 = vld [vmem:[%s1 + $0x290] sm:$0xff]
        %v318 = vld [vmem:[%s1 + $0x298] sm:$0xff]
        %v319 = vld [vmem:[%s1 + $0x2a0] sm:$0xff]
        %v320 = vld [vmem:[%s1 + $0x2a8] sm:$0xf]
        %v321 = vld [vmem:[%s1 + $0x2ac] sm:$0xff]
        %v322 = vld [vmem:[%s1 + $0x2b4] sm:$0xff]
        %v323 = vld [vmem:[%s1 + $0x2bc] sm:$0xff]
        %v324 = vld [vmem:[%s1 + $0x2c4] sm:$0xff]
        %v325 = vld [vmem:[%s1 + $0x2cc] sm:$0xf]
        %v326 = vld [vmem:[%s1 + $0x2d0] sm:$0xff]
        %v327 = vld [vmem:[%s1 + $0x2d8] sm:$0xff]
        %v328 = vld [vmem:[%s1 + $0x2e0] sm:$0xff]
        %v329 = vld [vmem:[%s1 + $0x2e8] sm:$0xff]
        %v330 = vld [vmem:[%s1 + $0x2f0] sm:$0xf]
        %v331 = vld [vmem:[%s1 + $0x2f4] sm:$0xff]
        %v332 = vld [vmem:[%s1 + $0x2fc] sm:$0xff]
        %v333 = vld [vmem:[%s1 + $0x304] sm:$0xff]
        %v334 = vld [vmem:[%s1 + $0x30c] sm:$0xff]
        %v335 = vld [vmem:[%s1 + $0x314] sm:$0xf]
        %v336 = vld [vmem:[%s1 + $0x318] sm:$0xff]
        %v337 = vld [vmem:[%s1 + $0x320] sm:$0xff]
        %v338 = vld [vmem:[%s1 + $0x328] sm:$0xff]
        %v339 = vld [vmem:[%s1 + $0x330] sm:$0xff]
        %v340 = vld [vmem:[%s1 + $0x338] sm:$0xf]
        %v341 = vld [vmem:[%s1 + $0x33c] sm:$0xff]
        %v342 = vld [vmem:[%s1 + $0x344] sm:$0xff]
        %v343 = vld [vmem:[%s1 + $0x34c] sm:$0xff]
        %v344 = vld [vmem:[%s1 + $0x354] sm:$0xff]
        %v345 = vld [vmem:[%s1 + $0x35c] sm:$0xf]
        %v346 = vld [vmem:[%s1 + $0x360] sm:$0xff]
        %v347 = vld [vmem:[%s1 + $0x368] sm:$0xff]
        %v348 = vld [vmem:[%s1 + $0x370] sm:$0xff]
        %v349 = vld [vmem:[%s1 + $0x378] sm:$0xff]
        %v350 = vld [vmem:[%s1 + $0x380] sm:$0xf]
        %v351 = vld [vmem:[%s1 + $0x384] sm:$0xff]
        %v352 = vld [vmem:[%s1 + $0x38c] sm:$0xff]
        %v353 = vld [vmem:[%s1 + $0x394] sm:$0xff]
        %v354 = vld [vmem:[%s1 + $0x39c] sm:$0xff]
        %v355 = vld [vmem:[%s1 + $0x3a4] sm:$0xf]
        %v356 = vld [vmem:[%s1 + $0x3a8] sm:$0xff]
        %v357 = vld [vmem:[%s1 + $0x3b0] sm:$0xff]
        %v358 = vld [vmem:[%s1 + $0x3b8] sm:$0xff]
        %v359 = vld [vmem:[%s1 + $0x3c0] sm:$0xff]
        %v360 = vld [vmem:[%s1 + $0x3c8] sm:$0xf]
        %v361 = vld [vmem:[%s1 + $0x3cc] sm:$0xff]
        %v362 = vld [vmem:[%s1 + $0x3d4] sm:$0xff]
        %v363 = vld [vmem:[%s1 + $0x3dc] sm:$0xff]
        %v364 = vld [vmem:[%s1 + $0x3e4] sm:$0xff]
        %v365 = vld [vmem:[%s1 + $0x3ec] sm:$0xf]
        %v366 = vld [vmem:[%s1 + $0x3f0] sm:$0xff]
        %v367 = vld [vmem:[%s1 + $0x3f8] sm:$0xff]
        %v368 = vld [vmem:[%s1 + $0x400] sm:$0xff]
        %v369 = vld [vmem:[%s1 + $0x408] sm:$0xff]
        %v370 = vld [vmem:[%s1 + $0x410] sm:$0xf]
        %v371 = vld [vmem:[%s1 + $0x414] sm:$0xff]
        %v372 = vld [vmem:[%s1 + $0x41c] sm:$0xff]
        %v373 = vld [vmem:[%s1 + $0x424] sm:$0xff]
        %v374 = vld [vmem:[%s1 + $0x42c] sm:$0xff]
        %v375 = vld [vmem:[%s1 + $0x434] sm:$0xf]
        %v376 = vld [vmem:[%s1 + $0x438] sm:$0xff]
        %v377 = vld [vmem:[%s1 + $0x440] sm:$0xff]
        %v378 = vld [vmem:[%s1 + $0x448] sm:$0xff]
        %v379 = vld [vmem:[%s1 + $0x450] sm:$0xff]
        %v380 = vld [vmem:[%s1 + $0x458] sm:$0xf]
        %v381 = vld [vmem:[%s1 + $0x45c] sm:$0xff]
        %v382 = vld [vmem:[%s1 + $0x464] sm:$0xff]
        %v383 = vld [vmem:[%s1 + $0x46c] sm:$0xff]
        %v384 = vld [vmem:[%s1 + $0x474] sm:$0xff]
        %v385 = vld [vmem:[%s1 + $0x47c] sm:$0xf]
        %v386 = vld [vmem:[%s1 + $0x480] sm:$0xff]
        %v387 = vld [vmem:[%s1 + $0x488] sm:$0xff]
        %v388 = vld [vmem:[%s1 + $0x490] sm:$0xff]
        %v389 = vld [vmem:[%s1 + $0x498] sm:$0xff]
        %v390 = vld [vmem:[%s1 + $0x4a0] sm:$0xf]
        %v391 = vld [vmem:[%s1 + $0x4a4] sm:$0xff]
        %v392 = vld [vmem:[%s1 + $0x4ac] sm:$0xff]
        %v393 = vld [vmem:[%s1 + $0x4b4] sm:$0xff]
        %v394 = vld [vmem:[%s1 + $0x4bc] sm:$0xff]
        %v395 = vld [vmem:[%s1 + $0x4c4] sm:$0xf]
        %v396 = vld [vmem:[%s1 + $0x4c8] sm:$0xff]
        %v397 = vld [vmem:[%s1 + $0x4d0] sm:$0xff]
        %v398 = vld [vmem:[%s1 + $0x4d8] sm:$0xff]
        %v399 = vld [vmem:[%s1 + $0x4e0] sm:$0xff]
        %v400 = vld [vmem:[%s1 + $0x4e8] sm:$0xf]
        %v401 = vld [vmem:[%s1 + $0x4ec] sm:$0x33]
        %v402 = vld [vmem:[%s1 + $0x4f4] sm:$0x33]
        %v403 = vld [vmem:[%s1 + $0x4fc] sm:$0x33]
        %v404 = vld [vmem:[%s1 + $0x504] sm:$0x33]
        %v405 = vld [vmem:[%s1 + $0x50c] sm:$0x3]
        %v406 = vld [vmem:[%s2] sm:$0xff]
        %v407 = vld [vmem:[%s2 + $0x8] sm:$0x1]
        %v410 = vperm.slane %v406, 0
        %v411 = vperm.slane %v406, 1
        %v412 = vperm.slane %v406, 2
        %v413 = vperm.slane %v406, 3
        %v414 = vperm.slane %v406, 4
        %v415 = vperm.slane %v406, 5
        %v416 = vperm.slane %v406, 6
        %v417 = vperm.slane %v406, 7
        %v418 = vperm.slane %v407, 0
        %v430 = vunpack.c.l.b16 %v224
        %v431 = vunpack.c.h.b16 %v224
        %v432 = vunpack.c.l.b16 %v225
        %v433 = vpack.c.b16 %v430, %v430
        %v434 = vpack.c.b16 %v431, %v431
        %v435 = vpack.c.b16 %v432, %v432
        %v618 = vunpack.c.l.b16 %v226
        %v619 = vunpack.c.h.b16 %v226
        %v620 = vunpack.c.l.b16 %v227
        %v621 = vunpack.c.h.b16 %v227
        %v622 = vunpack.c.l.b16 %v228
        %v623 = vunpack.c.h.b16 %v228
        %v624 = vunpack.c.l.b16 %v229
        %v625 = vunpack.c.h.b16 %v229
        %v626 = vunpack.c.l.b16 %v230
        %v627 = vunpack.c.l.b16 %v231
        %v628 = vunpack.c.h.b16 %v231
        %v629 = vunpack.c.l.b16 %v232
        %v630 = vunpack.c.h.b16 %v232
        %v631 = vunpack.c.l.b16 %v233
        %v632 = vunpack.c.h.b16 %v233
        %v633 = vunpack.c.l.b16 %v234
        %v634 = vunpack.c.h.b16 %v234
        %v635 = vunpack.c.l.b16 %v235
        %v636 = vunpack.c.l.b16 %v236
        %v637 = vunpack.c.h.b16 %v236
        %v638 = vunpack.c.l.b16 %v237
        %v639 = vunpack.c.h.b16 %v237
        %v640 = vunpack.c.l.b16 %v238
        %v641 = vunpack.c.h.b16 %v238
        %v642 = vunpack.c.l.b16 %v239
        %v643 = vunpack.c.h.b16 %v239
        %v644 = vunpack.c.l.b16 %v240
        %v645 = vunpack.c.l.b16 %v241
        %v646 = vunpack.c.h.b16 %v241
        %v647 = vunpack.c.l.b16 %v242
        %v648 = vunpack.c.h.b16 %v242
        %v649 = vunpack.c.l.b16 %v243
        %v650 = vunpack.c.h.b16 %v243
        %v651 = vunpack.c.l.b16 %v244
        %v652 = vunpack.c.h.b16 %v244
        %v653 = vunpack.c.l.b16 %v245
        %v654 = vunpack.c.l.b16 %v246
        %v655 = vunpack.c.h.b16 %v246
        %v656 = vunpack.c.l.b16 %v247
        %v657 = vunpack.c.h.b16 %v247
        %v658 = vunpack.c.l.b16 %v248
        %v659 = vunpack.c.h.b16 %v248
        %v660 = vunpack.c.l.b16 %v249
        %v661 = vunpack.c.h.b16 %v249
        %v662 = vunpack.c.l.b16 %v250
        %v663 = vunpack.c.l.b16 %v251
        %v664 = vunpack.c.h.b16 %v251
        %v665 = vunpack.c.l.b16 %v252
        %v666 = vunpack.c.h.b16 %v252
        %v667 = vunpack.c.l.b16 %v253
        %v668 = vunpack.c.h.b16 %v253
        %v669 = vunpack.c.l.b16 %v254
        %v670 = vunpack.c.h.b16 %v254
        %v671 = vunpack.c.l.b16 %v255
        %v672 = vunpack.c.l.b16 %v256
        %v673 = vunpack.c.h.b16 %v256
        %v674 = vunpack.c.l.b16 %v257
        %v675 = vunpack.c.h.b16 %v257
        %v676 = vunpack.c.l.b16 %v258
        %v677 = vunpack.c.h.b16 %v258
        %v678 = vunpack.c.l.b16 %v259
        %v679 = vunpack.c.h.b16 %v259
        %v680 = vunpack.c.l.b16 %v260
        %v681 = vunpack.c.l.b16 %v261
        %v682 = vunpack.c.h.b16 %v261
        %v683 = vunpack.c.l.b16 %v262
        %v684 = vunpack.c.h.b16 %v262
        %v685 = vunpack.c.l.b16 %v263
        %v686 = vunpack.c.h.b16 %v263
        %v687 = vunpack.c.l.b16 %v264
        %v688 = vunpack.c.h.b16 %v264
        %v689 = vunpack.c.l.b16 %v265
        %v690 = vunpack.c.l.b16 %v266
        %v691 = vunpack.c.h.b16 %v266
        %v692 = vunpack.c.l.b16 %v267
        %v693 = vunpack.c.h.b16 %v267
        %v694 = vunpack.c.l.b16 %v268
        %v695 = vunpack.c.h.b16 %v268
        %v696 = vunpack.c.l.b16 %v269
        %v697 = vunpack.c.h.b16 %v269
        %v698 = vunpack.c.l.b16 %v270
        %v699 = vunpack.c.l.b16 %v271
        %v700 = vunpack.c.h.b16 %v271
        %v701 = vunpack.c.l.b16 %v272
        %v702 = vunpack.c.h.b16 %v272
        %v703 = vunpack.c.l.b16 %v273
        %v704 = vunpack.c.h.b16 %v273
        %v705 = vunpack.c.l.b16 %v274
        %v706 = vunpack.c.h.b16 %v274
        %v707 = vunpack.c.l.b16 %v275
        %v708 = vunpack.c.l.b16 %v276
        %v709 = vunpack.c.h.b16 %v276
        %v710 = vunpack.c.l.b16 %v277
        %v711 = vunpack.c.h.b16 %v277
        %v712 = vunpack.c.l.b16 %v278
        %v713 = vunpack.c.h.b16 %v278
        %v714 = vunpack.c.l.b16 %v279
        %v715 = vunpack.c.h.b16 %v279
        %v716 = vunpack.c.l.b16 %v280
        %v717 = vunpack.c.l.b16 %v281
        %v718 = vunpack.c.h.b16 %v281
        %v719 = vunpack.c.l.b16 %v282
        %v720 = vunpack.c.h.b16 %v282
        %v721 = vunpack.c.l.b16 %v283
        %v722 = vunpack.c.h.b16 %v283
        %v723 = vunpack.c.l.b16 %v284
        %v724 = vunpack.c.h.b16 %v284
        %v725 = vunpack.c.l.b16 %v285
        %v726 = vunpack.c.l.b16 %v286
        %v727 = vunpack.c.h.b16 %v286
        %v728 = vunpack.c.l.b16 %v287
        %v729 = vunpack.c.h.b16 %v287
        %v730 = vunpack.c.l.b16 %v288
        %v731 = vunpack.c.h.b16 %v288
        %v732 = vunpack.c.l.b16 %v289
        %v733 = vunpack.c.h.b16 %v289
        %v734 = vunpack.c.l.b16 %v290
        %v735 = vunpack.c.l.b16 %v291
        %v736 = vunpack.c.h.b16 %v291
        %v737 = vunpack.c.l.b16 %v292
        %v738 = vunpack.c.h.b16 %v292
        %v739 = vunpack.c.l.b16 %v293
        %v740 = vunpack.c.h.b16 %v293
        %v741 = vunpack.c.l.b16 %v294
        %v742 = vunpack.c.h.b16 %v294
        %v743 = vunpack.c.l.b16 %v295
        %v744 = vunpack.c.l.b16 %v296
        %v745 = vunpack.c.h.b16 %v296
        %v746 = vunpack.c.l.b16 %v297
        %v747 = vunpack.c.h.b16 %v297
        %v748 = vunpack.c.l.b16 %v298
        %v749 = vunpack.c.h.b16 %v298
        %v750 = vunpack.c.l.b16 %v299
        %v751 = vunpack.c.h.b16 %v299
        %v752 = vunpack.c.l.b16 %v300
        %v753 = vunpack.c.l.b16 %v301
        %v754 = vunpack.c.h.b16 %v301
        %v755 = vunpack.c.l.b16 %v302
        %v756 = vunpack.c.h.b16 %v302
        %v757 = vunpack.c.l.b16 %v303
        %v758 = vunpack.c.h.b16 %v303
        %v759 = vunpack.c.l.b16 %v304
        %v760 = vunpack.c.h.b16 %v304
        %v761 = vunpack.c.l.b16 %v305
        %v762 = vunpack.c.l.b16 %v306
        %v763 = vunpack.c.h.b16 %v306
        %v764 = vunpack.c.l.b16 %v307
        %v765 = vunpack.c.h.b16 %v307
        %v766 = vunpack.c.l.b16 %v308
        %v767 = vunpack.c.h.b16 %v308
        %v768 = vunpack.c.l.b16 %v309
        %v769 = vunpack.c.h.b16 %v309
        %v770 = vunpack.c.l.b16 %v310
        %v771 = vunpack.c.l.b16 %v311
        %v772 = vunpack.c.h.b16 %v311
        %v773 = vunpack.c.l.b16 %v312
        %v774 = vunpack.c.h.b16 %v312
        %v775 = vunpack.c.l.b16 %v313
        %v776 = vunpack.c.h.b16 %v313
        %v777 = vunpack.c.l.b16 %v314
        %v778 = vunpack.c.h.b16 %v314
        %v779 = vunpack.c.l.b16 %v315
        %v780 = vunpack.c.l.b16 %v316
        %v781 = vunpack.c.h.b16 %v316
        %v782 = vunpack.c.l.b16 %v317
        %v783 = vunpack.c.h.b16 %v317
        %v784 = vunpack.c.l.b16 %v318
        %v785 = vunpack.c.h.b16 %v318
        %v786 = vunpack.c.l.b16 %v319
        %v787 = vunpack.c.h.b16 %v319
        %v788 = vunpack.c.l.b16 %v320
        %v789 = vunpack.c.l.b16 %v321
        %v790 = vunpack.c.h.b16 %v321
        %v791 = vunpack.c.l.b16 %v322
        %v792 = vunpack.c.h.b16 %v322
        %v793 = vunpack.c.l.b16 %v323
        %v794 = vunpack.c.h.b16 %v323
        %v795 = vunpack.c.l.b16 %v324
        %v796 = vunpack.c.h.b16 %v324
        %v797 = vunpack.c.l.b16 %v325
        %v798 = vunpack.c.l.b16 %v326
        %v799 = vunpack.c.h.b16 %v326
        %v800 = vunpack.c.l.b16 %v327
        %v801 = vunpack.c.h.b16 %v327
        %v802 = vunpack.c.l.b16 %v328
        %v803 = vunpack.c.h.b16 %v328
        %v804 = vunpack.c.l.b16 %v329
        %v805 = vunpack.c.h.b16 %v329
        %v806 = vunpack.c.l.b16 %v330
        %v807 = vunpack.c.l.b16 %v331
        %v808 = vunpack.c.h.b16 %v331
        %v809 = vunpack.c.l.b16 %v332
        %v810 = vunpack.c.h.b16 %v332
        %v811 = vunpack.c.l.b16 %v333
        %v812 = vunpack.c.h.b16 %v333
        %v813 = vunpack.c.l.b16 %v334
        %v814 = vunpack.c.h.b16 %v334
        %v815 = vunpack.c.l.b16 %v335
        %v816 = vunpack.c.l.b16 %v336
        %v817 = vunpack.c.h.b16 %v336
        %v818 = vunpack.c.l.b16 %v337
        %v819 = vunpack.c.h.b16 %v337
        %v820 = vunpack.c.l.b16 %v338
        %v821 = vunpack.c.h.b16 %v338
        %v822 = vunpack.c.l.b16 %v339
        %v823 = vunpack.c.h.b16 %v339
        %v824 = vunpack.c.l.b16 %v340
        %v825 = vunpack.c.l.b16 %v341
        %v826 = vunpack.c.h.b16 %v341
        %v827 = vunpack.c.l.b16 %v342
        %v828 = vunpack.c.h.b16 %v342
        %v829 = vunpack.c.l.b16 %v343
        %v830 = vunpack.c.h.b16 %v343
        %v831 = vunpack.c.l.b16 %v344
        %v832 = vunpack.c.h.b16 %v344
        %v833 = vunpack.c.l.b16 %v345
        %v834 = vunpack.c.l.b16 %v346
        %v835 = vunpack.c.h.b16 %v346
        %v836 = vunpack.c.l.b16 %v347
        %v837 = vunpack.c.h.b16 %v347
        %v838 = vunpack.c.l.b16 %v348
        %v839 = vunpack.c.h.b16 %v348
        %v840 = vunpack.c.l.b16 %v349
        %v841 = vunpack.c.h.b16 %v349
        %v842 = vunpack.c.l.b16 %v350
        %v843 = vunpack.c.l.b16 %v351
        %v844 = vunpack.c.h.b16 %v351
        %v845 = vunpack.c.l.b16 %v352
        %v846 = vunpack.c.h.b16 %v352
        %v847 = vunpack.c.l.b16 %v353
        %v848 = vunpack.c.h.b16 %v353
        %v849 = vunpack.c.l.b16 %v354
        %v850 = vunpack.c.h.b16 %v354
        %v851 = vunpack.c.l.b16 %v355
        %v852 = vunpack.c.l.b16 %v356
        %v853 = vunpack.c.h.b16 %v356
        %v854 = vunpack.c.l.b16 %v357
        %v855 = vunpack.c.h.b16 %v357
        %v856 = vunpack.c.l.b16 %v358
        %v857 = vunpack.c.h.b16 %v358
        %v858 = vunpack.c.l.b16 %v359
        %v859 = vunpack.c.h.b16 %v359
        %v860 = vunpack.c.l.b16 %v360
        %v861 = vunpack.c.l.b16 %v361
        %v862 = vunpack.c.h.b16 %v361
        %v863 = vunpack.c.l.b16 %v362
        %v864 = vunpack.c.h.b16 %v362
        %v865 = vunpack.c.l.b16 %v363
        %v866 = vunpack.c.h.b16 %v363
        %v867 = vunpack.c.l.b16 %v364
        %v868 = vunpack.c.h.b16 %v364
        %v869 = vunpack.c.l.b16 %v365
        %v870 = vunpack.c.l.b16 %v366
        %v871 = vunpack.c.h.b16 %v366
        %v872 = vunpack.c.l.b16 %v367
        %v873 = vunpack.c.h.b16 %v367
        %v874 = vunpack.c.l.b16 %v368
        %v875 = vunpack.c.h.b16 %v368
        %v876 = vunpack.c.l.b16 %v369
        %v877 = vunpack.c.h.b16 %v369
        %v878 = vunpack.c.l.b16 %v370
        %v879 = vunpack.c.l.b16 %v371
        %v880 = vunpack.c.h.b16 %v371
        %v881 = vunpack.c.l.b16 %v372
        %v882 = vunpack.c.h.b16 %v372
        %v883 = vunpack.c.l.b16 %v373
        %v884 = vunpack.c.h.b16 %v373
        %v885 = vunpack.c.l.b16 %v374
        %v886 = vunpack.c.h.b16 %v374
        %v887 = vunpack.c.l.b16 %v375
        %v888 = vunpack.c.l.b16 %v376
        %v889 = vunpack.c.h.b16 %v376
        %v890 = vunpack.c.l.b16 %v377
        %v891 = vunpack.c.h.b16 %v377
        %v892 = vunpack.c.l.b16 %v378
        %v893 = vunpack.c.h.b16 %v378
        %v894 = vunpack.c.l.b16 %v379
        %v895 = vunpack.c.h.b16 %v379
        %v896 = vunpack.c.l.b16 %v380
        %v897 = vunpack.c.l.b16 %v381
        %v898 = vunpack.c.h.b16 %v381
        %v899 = vunpack.c.l.b16 %v382
        %v900 = vunpack.c.h.b16 %v382
        %v901 = vunpack.c.l.b16 %v383
        %v902 = vunpack.c.h.b16 %v383
        %v903 = vunpack.c.l.b16 %v384
        %v904 = vunpack.c.h.b16 %v384
        %v905 = vunpack.c.l.b16 %v385
        %v906 = vunpack.c.l.b16 %v386
        %v907 = vunpack.c.h.b16 %v386
        %v908 = vunpack.c.l.b16 %v387
        %v909 = vunpack.c.h.b16 %v387
        %v910 = vunpack.c.l.b16 %v388
        %v911 = vunpack.c.h.b16 %v388
        %v912 = vunpack.c.l.b16 %v389
        %v913 = vunpack.c.h.b16 %v389
        %v914 = vunpack.c.l.b16 %v390
        %v915 = vunpack.c.l.b16 %v391
        %v916 = vunpack.c.h.b16 %v391
        %v917 = vunpack.c.l.b16 %v392
        %v918 = vunpack.c.h.b16 %v392
        %v919 = vunpack.c.l.b16 %v393
        %v920 = vunpack.c.h.b16 %v393
        %v921 = vunpack.c.l.b16 %v394
        %v922 = vunpack.c.h.b16 %v394
        %v923 = vunpack.c.l.b16 %v395
        %v924 = vunpack.c.l.b16 %v396
        %v925 = vunpack.c.h.b16 %v396
        %v926 = vunpack.c.l.b16 %v397
        %v927 = vunpack.c.h.b16 %v397
        %v928 = vunpack.c.l.b16 %v398
        %v929 = vunpack.c.h.b16 %v398
        %v930 = vunpack.c.l.b16 %v399
        %v931 = vunpack.c.h.b16 %v399
        %v932 = vunpack.c.l.b16 %v400
        %v933 = vunpack.c.l.b16 %v401
        %v934 = vunpack.c.h.b16 %v401
        %v935 = vunpack.c.l.b16 %v402
        %v936 = vunpack.c.h.b16 %v402
        %v937 = vunpack.c.l.b16 %v403
        %v938 = vunpack.c.h.b16 %v403
        %v939 = vunpack.c.l.b16 %v404
        %v940 = vunpack.c.h.b16 %v404
        %v941 = vunpack.c.l.b16 %v405
        %v942 = vpack.c.b16 %v627, %v618
        %v943 = vpack.c.b16 %v628, %v619
        %v944 = vpack.c.b16 %v629, %v620
        %v945 = vpack.c.b16 %v630, %v621
        %v946 = vpack.c.b16 %v631, %v622
        %v947 = vpack.c.b16 %v632, %v623
        %v948 = vpack.c.b16 %v633, %v624
        %v949 = vpack.c.b16 %v634, %v625
        %v950 = vpack.c.b16 %v635, %v626
        %v951 = vpack.c.b16 %v645, %v636
        %v952 = vpack.c.b16 %v646, %v637
        %v953 = vpack.c.b16 %v647, %v638
        %v954 = vpack.c.b16 %v648, %v639
        %v955 = vpack.c.b16 %v649, %v640
        %v956 = vpack.c.b16 %v650, %v641
        %v957 = vpack.c.b16 %v651, %v642
        %v958 = vpack.c.b16 %v652, %v643
        %v959 = vpack.c.b16 %v653, %v644
        %v960 = vpack.c.b16 %v663, %v654
        %v961 = vpack.c.b16 %v664, %v655
        %v962 = vpack.c.b16 %v665, %v656
        %v963 = vpack.c.b16 %v666, %v657
        %v964 = vpack.c.b16 %v667, %v658
        %v965 = vpack.c.b16 %v668, %v659
        %v966 = vpack.c.b16 %v669, %v660
        %v967 = vpack.c.b16 %v670, %v661
        %v968 = vpack.c.b16 %v671, %v662
        %v969 = vpack.c.b16 %v681, %v672
        %v970 = vpack.c.b16 %v682, %v673
        %v971 = vpack.c.b16 %v683, %v674
        %v972 = vpack.c.b16 %v684, %v675
        %v973 = vpack.c.b16 %v685, %v676
        %v974 = vpack.c.b16 %v686, %v677
        %v975 = vpack.c.b16 %v687, %v678
        %v976 = vpack.c.b16 %v688, %v679
        %v977 = vpack.c.b16 %v689, %v680
        %v978 = vpack.c.b16 %v699, %v690
        %v979 = vpack.c.b16 %v700, %v691
        %v980 = vpack.c.b16 %v701, %v692
        %v981 = vpack.c.b16 %v702, %v693
        %v982 = vpack.c.b16 %v703, %v694
        %v983 = vpack.c.b16 %v704, %v695
        %v984 = vpack.c.b16 %v705, %v696
        %v985 = vpack.c.b16 %v706, %v697
        %v986 = vpack.c.b16 %v707, %v698
        %v987 = vpack.c.b16 %v717, %v708
        %v988 = vpack.c.b16 %v718, %v709
        %v989 = vpack.c.b16 %v719, %v710
        %v990 = vpack.c.b16 %v720, %v711
        %v991 = vpack.c.b16 %v721, %v712
        %v992 = vpack.c.b16 %v722, %v713
        %v993 = vpack.c.b16 %v723, %v714
        %v994 = vpack.c.b16 %v724, %v715
        %v995 = vpack.c.b16 %v725, %v716
        %v996 = vpack.c.b16 %v735, %v726
        %v997 = vpack.c.b16 %v736, %v727
        %v998 = vpack.c.b16 %v737, %v728
        %v999 = vpack.c.b16 %v738, %v729
        %v1000 = vpack.c.b16 %v739, %v730
        %v1001 = vpack.c.b16 %v740, %v731
        %v1002 = vpack.c.b16 %v741, %v732
        %v1003 = vpack.c.b16 %v742, %v733
        %v1004 = vpack.c.b16 %v743, %v734
        %v1005 = vpack.c.b16 %v753, %v744
        %v1006 = vpack.c.b16 %v754, %v745
        %v1007 = vpack.c.b16 %v755, %v746
        %v1008 = vpack.c.b16 %v756, %v747
        %v1009 = vpack.c.b16 %v757, %v748
        %v1010 = vpack.c.b16 %v758, %v749
        %v1011 = vpack.c.b16 %v759, %v750
        %v1012 = vpack.c.b16 %v760, %v751
        %v1013 = vpack.c.b16 %v761, %v752
        %v1014 = vpack.c.b16 %v771, %v762
        %v1015 = vpack.c.b16 %v772, %v763
        %v1016 = vpack.c.b16 %v773, %v764
        %v1017 = vpack.c.b16 %v774, %v765
        %v1018 = vpack.c.b16 %v775, %v766
        %v1019 = vpack.c.b16 %v776, %v767
        %v1020 = vpack.c.b16 %v777, %v768
        %v1021 = vpack.c.b16 %v778, %v769
        %v1022 = vpack.c.b16 %v779, %v770
        %v1023 = vpack.c.b16 %v789, %v780
        %v1024 = vpack.c.b16 %v790, %v781
        %v1025 = vpack.c.b16 %v791, %v782
        %v1026 = vpack.c.b16 %v792, %v783
        %v1027 = vpack.c.b16 %v793, %v784
        %v1028 = vpack.c.b16 %v794, %v785
        %v1029 = vpack.c.b16 %v795, %v786
        %v1030 = vpack.c.b16 %v796, %v787
        %v1031 = vpack.c.b16 %v797, %v788
        %v1032 = vpack.c.b16 %v807, %v798
        %v1033 = vpack.c.b16 %v808, %v799
        %v1034 = vpack.c.b16 %v809, %v800
        %v1035 = vpack.c.b16 %v810, %v801
        %v1036 = vpack.c.b16 %v811, %v802
        %v1037 = vpack.c.b16 %v812, %v803
        %v1038 = vpack.c.b16 %v813, %v804
        %v1039 = vpack.c.b16 %v814, %v805
        %v1040 = vpack.c.b16 %v815, %v806
        %v1041 = vpack.c.b16 %v825, %v816
        %v1042 = vpack.c.b16 %v826, %v817
        %v1043 = vpack.c.b16 %v827, %v818
        %v1044 = vpack.c.b16 %v828, %v819
        %v1045 = vpack.c.b16 %v829, %v820
        %v1046 = vpack.c.b16 %v830, %v821
        %v1047 = vpack.c.b16 %v831, %v822
        %v1048 = vpack.c.b16 %v832, %v823
        %v1049 = vpack.c.b16 %v833, %v824
        %v1050 = vpack.c.b16 %v843, %v834
        %v1051 = vpack.c.b16 %v844, %v835
        %v1052 = vpack.c.b16 %v845, %v836
        %v1053 = vpack.c.b16 %v846, %v837
        %v1054 = vpack.c.b16 %v847, %v838
        %v1055 = vpack.c.b16 %v848, %v839
        %v1056 = vpack.c.b16 %v849, %v840
        %v1057 = vpack.c.b16 %v850, %v841
        %v1058 = vpack.c.b16 %v851, %v842
        %v1059 = vpack.c.b16 %v861, %v852
        %v1060 = vpack.c.b16 %v862, %v853
        %v1061 = vpack.c.b16 %v863, %v854
        %v1062 = vpack.c.b16 %v864, %v855
        %v1063 = vpack.c.b16 %v865, %v856
        %v1064 = vpack.c.b16 %v866, %v857
        %v1065 = vpack.c.b16 %v867, %v858
        %v1066 = vpack.c.b16 %v868, %v859
        %v1067 = vpack.c.b16 %v869, %v860
        %v1068 = vpack.c.b16 %v879, %v870
        %v1069 = vpack.c.b16 %v880, %v871
        %v1070 = vpack.c.b16 %v881, %v872
        %v1071 = vpack.c.b16 %v882, %v873
        %v1072 = vpack.c.b16 %v883, %v874
        %v1073 = vpack.c.b16 %v884, %v875
        %v1074 = vpack.c.b16 %v885, %v876
        %v1075 = vpack.c.b16 %v886, %v877
        %v1076 = vpack.c.b16 %v887, %v878
        %v1077 = vpack.c.b16 %v897, %v888
        %v1078 = vpack.c.b16 %v898, %v889
        %v1079 = vpack.c.b16 %v899, %v890
        %v1080 = vpack.c.b16 %v900, %v891
        %v1081 = vpack.c.b16 %v901, %v892
        %v1082 = vpack.c.b16 %v902, %v893
        %v1083 = vpack.c.b16 %v903, %v894
        %v1084 = vpack.c.b16 %v904, %v895
        %v1085 = vpack.c.b16 %v905, %v896
        %v1086 = vpack.c.b16 %v915, %v906
        %v1087 = vpack.c.b16 %v916, %v907
        %v1088 = vpack.c.b16 %v917, %v908
        %v1089 = vpack.c.b16 %v918, %v909
        %v1090 = vpack.c.b16 %v919, %v910
        %v1091 = vpack.c.b16 %v920, %v911
        %v1092 = vpack.c.b16 %v921, %v912
        %v1093 = vpack.c.b16 %v922, %v913
        %v1094 = vpack.c.b16 %v923, %v914
        %v1095 = vpack.c.b16 %v933, %v924
        %v1096 = vpack.c.b16 %v934, %v925
        %v1097 = vpack.c.b16 %v935, %v926
        %v1098 = vpack.c.b16 %v936, %v927
        %v1099 = vpack.c.b16 %v937, %v928
        %v1100 = vpack.c.b16 %v938, %v929
        %v1101 = vpack.c.b16 %v939, %v930
        %v1102 = vpack.c.b16 %v940, %v931
        %v1103 = vpack.c.b16 %v941, %v932
        %vm1257 = vcmask 228352
        %v1259 = vsel %vm1257, %v435, 0
        %vm1261 = vcmask 1045504
        %v1263 = vsel %vm1261, %v1095, 0
        %v1266 = vsel %vm1261, %v1096, 0
        %v1269 = vsel %vm1261, %v1097, 0
        %v1272 = vsel %vm1261, %v1098, 0
        %v1275 = vsel %vm1261, %v1099, 0
        %v1278 = vsel %vm1261, %v1100, 0
        %v1281 = vsel %vm1261, %v1101, 0
        %v1284 = vsel %vm1261, %v1102, 0
        %v1287 = vsel %vm1261, %v1103, 0
        %1289 = vmatpush.bf16.msra.mxu0 %v1005
        %1290 = vmatpush.bf16.msra.mxu0 %v996
        %1291 = vmatpush.bf16.msra.mxu0 %v987
        %1292 = vmatpush.bf16.msra.mxu0 %v978
        %1293 = vmatpush.bf16.msra.mxu0 %v969
        %1294 = vmatpush.bf16.msra.mxu0 %v960
        %1295 = vmatpush.bf16.msra.mxu0 %v951
        %1296 = vmatpush.bf16.msra.mxu0 %v942
        %1297 = vmatmul.bf16.gmra.mxu0 %v433
        %v1298 = vpop.f32.mrf.mxu0
        %v1299 = vadd.f32 %v410, %v1298
        %v1300 = vpop.f32.mrf.mxu0
        %1301 = vdwg.mxu0
        %1302 = vmatpush.bf16.msra.mxu0 %v1077
        %1303 = vmatpush.bf16.msra.mxu0 %v1068
        %1304 = vmatpush.bf16.msra.mxu0 %v1059
        %1305 = vmatpush.bf16.msra.mxu0 %v1050
        %1306 = vmatpush.bf16.msra.mxu0 %v1041
        %1307 = vmatpush.bf16.msra.mxu0 %v1032
        %1308 = vmatpush.bf16.msra.mxu0 %v1023
        %1309 = vmatpush.bf16.msra.mxu0 %v1014
        %1310 = vmatmul.bf16.gmra.mxu0 %v434
        %v1311 = vpop.f32.mrf.mxu0
        %v1312 = vadd.f32 %v1299, %v1311
        %v1313 = vpop.f32.mrf.mxu0
        %1314 = vdwg.mxu0
        %1315 = vmatpush.bf16.msra.mxu0 0
        %1316 = vmatpush.bf16.msra.mxu0 0
        %1317 = vmatpush.bf16.msra.mxu0 0
        %1318 = vmatpush.bf16.msra.mxu0 0
        %1319 = vmatpush.bf16.msra.mxu0 0
        %1320 = vmatpush.bf16.msra.mxu0 0
        %1321 = vmatpush.bf16.msra.mxu0 %v1263
        %1322 = vmatpush.bf16.msra.mxu0 %v1086
        %1323 = vmatmul.bf16.gmra.mxu0 %v1259
        %v1324 = vpop.f32.mrf.mxu0
        %v1325 = vadd.f32 %v1312, %v1324
        %v1326 = vpop.f32.mrf.mxu0
        %1327 = vdwg.mxu0
        %1328 = vmatpush.bf16.msra.mxu0 %v1006
        %1329 = vmatpush.bf16.msra.mxu0 %v997
        %1330 = vmatpush.bf16.msra.mxu0 %v988
        %1331 = vmatpush.bf16.msra.mxu0 %v979
        %1332 = vmatpush.bf16.msra.mxu0 %v970
        %1333 = vmatpush.bf16.msra.mxu0 %v961
        %1334 = vmatpush.bf16.msra.mxu0 %v952
        %1335 = vmatpush.bf16.msra.mxu0 %v943
        %1336 = vmatmul.bf16.gmra.mxu0 %v433
        %v1337 = vpop.f32.mrf.mxu0
        %v1338 = vadd.f32 %v411, %v1337
        %v1339 = vpop.f32.mrf.mxu0
        %1340 = vdwg.mxu0
        %1341 = vmatpush.bf16.msra.mxu0 %v1078
        %1342 = vmatpush.bf16.msra.mxu0 %v1069
        %1343 = vmatpush.bf16.msra.mxu0 %v1060
        %1344 = vmatpush.bf16.msra.mxu0 %v1051
        %1345 = vmatpush.bf16.msra.mxu0 %v1042
        %1346 = vmatpush.bf16.msra.mxu0 %v1033
        %1347 = vmatpush.bf16.msra.mxu0 %v1024
        %1348 = vmatpush.bf16.msra.mxu0 %v1015
        %1349 = vmatmul.bf16.gmra.mxu0 %v434
        %v1350 = vpop.f32.mrf.mxu0
        %v1351 = vadd.f32 %v1338, %v1350
        %v1352 = vpop.f32.mrf.mxu0
        %1353 = vdwg.mxu0
        %1354 = vmatpush.bf16.msra.mxu0 0
        %1355 = vmatpush.bf16.msra.mxu0 0
        %1356 = vmatpush.bf16.msra.mxu0 0
        %1357 = vmatpush.bf16.msra.mxu0 0
        %1358 = vmatpush.bf16.msra.mxu0 0
        %1359 = vmatpush.bf16.msra.mxu0 0
        %1360 = vmatpush.bf16.msra.mxu0 %v1266
        %1361 = vmatpush.bf16.msra.mxu0 %v1087
        %1362 = vmatmul.bf16.gmra.mxu0 %v1259
        %v1363 = vpop.f32.mrf.mxu0
        %v1364 = vadd.f32 %v1351, %v1363
        %v1365 = vpop.f32.mrf.mxu0
        %1366 = vdwg.mxu0
        %1367 = vmatpush.bf16.msra.mxu0 %v1007
        %1368 = vmatpush.bf16.msra.mxu0 %v998
        %1369 = vmatpush.bf16.msra.mxu0 %v989
        %1370 = vmatpush.bf16.msra.mxu0 %v980
        %1371 = vmatpush.bf16.msra.mxu0 %v971
        %1372 = vmatpush.bf16.msra.mxu0 %v962
        %1373 = vmatpush.bf16.msra.mxu0 %v953
        %1374 = vmatpush.bf16.msra.mxu0 %v944
        %1375 = vmatmul.bf16.gmra.mxu0 %v433
        %v1376 = vpop.f32.mrf.mxu0
        %v1377 = vadd.f32 %v412, %v1376
        %v1378 = vpop.f32.mrf.mxu0
        %1379 = vdwg.mxu0
        %1380 = vmatpush.bf16.msra.mxu0 %v1079
        %1381 = vmatpush.bf16.msra.mxu0 %v1070
        %1382 = vmatpush.bf16.msra.mxu0 %v1061
        %1383 = vmatpush.bf16.msra.mxu0 %v1052
        %1384 = vmatpush.bf16.msra.mxu0 %v1043
        %1385 = vmatpush.bf16.msra.mxu0 %v1034
        %1386 = vmatpush.bf16.msra.mxu0 %v1025
        %1387 = vmatpush.bf16.msra.mxu0 %v1016
        %1388 = vmatmul.bf16.gmra.mxu0 %v434
        %v1389 = vpop.f32.mrf.mxu0
        %v1390 = vadd.f32 %v1377, %v1389
        %v1391 = vpop.f32.mrf.mxu0
        %1392 = vdwg.mxu0
        %1393 = vmatpush.bf16.msra.mxu0 0
        %1394 = vmatpush.bf16.msra.mxu0 0
        %1395 = vmatpush.bf16.msra.mxu0 0
        %1396 = vmatpush.bf16.msra.mxu0 0
        %1397 = vmatpush.bf16.msra.mxu0 0
        %1398 = vmatpush.bf16.msra.mxu0 0
        %1399 = vmatpush.bf16.msra.mxu0 %v1269
        %1400 = vmatpush.bf16.msra.mxu0 %v1088
        %1401 = vmatmul.bf16.gmra.mxu0 %v1259
        %v1402 = vpop.f32.mrf.mxu0
        %v1403 = vadd.f32 %v1390, %v1402
        %v1404 = vpop.f32.mrf.mxu0
        %1405 = vdwg.mxu0
        %1406 = vmatpush.bf16.msra.mxu0 %v1008
        %1407 = vmatpush.bf16.msra.mxu0 %v999
        %1408 = vmatpush.bf16.msra.mxu0 %v990
        %1409 = vmatpush.bf16.msra.mxu0 %v981
        %1410 = vmatpush.bf16.msra.mxu0 %v972
        %1411 = vmatpush.bf16.msra.mxu0 %v963
        %1412 = vmatpush.bf16.msra.mxu0 %v954
        %1413 = vmatpush.bf16.msra.mxu0 %v945
        %1414 = vmatmul.bf16.gmra.mxu0 %v433
        %v1415 = vpop.f32.mrf.mxu0
        %v1416 = vadd.f32 %v413, %v1415
        %v1417 = vpop.f32.mrf.mxu0
        %1418 = vdwg.mxu0
        %1419 = vmatpush.bf16.msra.mxu0 %v1080
        %1420 = vmatpush.bf16.msra.mxu0 %v1071
        %1421 = vmatpush.bf16.msra.mxu0 %v1062
        %1422 = vmatpush.bf16.msra.mxu0 %v1053
        %1423 = vmatpush.bf16.msra.mxu0 %v1044
        %1424 = vmatpush.bf16.msra.mxu0 %v1035
        %1425 = vmatpush.bf16.msra.mxu0 %v1026
        %1426 = vmatpush.bf16.msra.mxu0 %v1017
        %1427 = vmatmul.bf16.gmra.mxu0 %v434
        %v1428 = vpop.f32.mrf.mxu0
        %v1429 = vadd.f32 %v1416, %v1428
        %v1430 = vpop.f32.mrf.mxu0
        %1431 = vdwg.mxu0
        %1432 = vmatpush.bf16.msra.mxu0 0
        %1433 = vmatpush.bf16.msra.mxu0 0
        %1434 = vmatpush.bf16.msra.mxu0 0
        %1435 = vmatpush.bf16.msra.mxu0 0
        %1436 = vmatpush.bf16.msra.mxu0 0
        %1437 = vmatpush.bf16.msra.mxu0 0
        %1438 = vmatpush.bf16.msra.mxu0 %v1272
        %1439 = vmatpush.bf16.msra.mxu0 %v1089
        %1440 = vmatmul.bf16.gmra.mxu0 %v1259
        %v1441 = vpop.f32.mrf.mxu0
        %v1442 = vadd.f32 %v1429, %v1441
        %v1443 = vpop.f32.mrf.mxu0
        %1444 = vdwg.mxu0
        %1445 = vmatpush.bf16.msra.mxu0 %v1009
        %1446 = vmatpush.bf16.msra.mxu0 %v1000
        %1447 = vmatpush.bf16.msra.mxu0 %v991
        %1448 = vmatpush.bf16.msra.mxu0 %v982
        %1449 = vmatpush.bf16.msra.mxu0 %v973
        %1450 = vmatpush.bf16.msra.mxu0 %v964
        %1451 = vmatpush.bf16.msra.mxu0 %v955
        %1452 = vmatpush.bf16.msra.mxu0 %v946
        %1453 = vmatmul.bf16.gmra.mxu0 %v433
        %v1454 = vpop.f32.mrf.mxu0
        %v1455 = vadd.f32 %v414, %v1454
        %v1456 = vpop.f32.mrf.mxu0
        %1457 = vdwg.mxu0
        %1458 = vmatpush.bf16.msra.mxu0 %v1081
        %1459 = vmatpush.bf16.msra.mxu0 %v1072
        %1460 = vmatpush.bf16.msra.mxu0 %v1063
        %1461 = vmatpush.bf16.msra.mxu0 %v1054
        %1462 = vmatpush.bf16.msra.mxu0 %v1045
        %1463 = vmatpush.bf16.msra.mxu0 %v1036
        %1464 = vmatpush.bf16.msra.mxu0 %v1027
        %1465 = vmatpush.bf16.msra.mxu0 %v1018
        %1466 = vmatmul.bf16.gmra.mxu0 %v434
        %v1467 = vpop.f32.mrf.mxu0
        %v1468 = vadd.f32 %v1455, %v1467
        %v1469 = vpop.f32.mrf.mxu0
        %1470 = vdwg.mxu0
        %1471 = vmatpush.bf16.msra.mxu0 0
        %1472 = vmatpush.bf16.msra.mxu0 0
        %1473 = vmatpush.bf16.msra.mxu0 0
        %1474 = vmatpush.bf16.msra.mxu0 0
        %1475 = vmatpush.bf16.msra.mxu0 0
        %1476 = vmatpush.bf16.msra.mxu0 0
        %1477 = vmatpush.bf16.msra.mxu0 %v1275
        %1478 = vmatpush.bf16.msra.mxu0 %v1090
        %1479 = vmatmul.bf16.gmra.mxu0 %v1259
        %v1480 = vpop.f32.mrf.mxu0
        %v1481 = vadd.f32 %v1468, %v1480
        %v1482 = vpop.f32.mrf.mxu0
        %1483 = vdwg.mxu0
        %1484 = vmatpush.bf16.msra.mxu0 %v1010
        %1485 = vmatpush.bf16.msra.mxu0 %v1001
        %1486 = vmatpush.bf16.msra.mxu0 %v992
        %1487 = vmatpush.bf16.msra.mxu0 %v983
        %1488 = vmatpush.bf16.msra.mxu0 %v974
        %1489 = vmatpush.bf16.msra.mxu0 %v965
        %1490 = vmatpush.bf16.msra.mxu0 %v956
        %1491 = vmatpush.bf16.msra.mxu0 %v947
        %1492 = vmatmul.bf16.gmra.mxu0 %v433
        %v1493 = vpop.f32.mrf.mxu0
        %v1494 = vadd.f32 %v415, %v1493
        %v1495 = vpop.f32.mrf.mxu0
        %1496 = vdwg.mxu0
        %1497 = vmatpush.bf16.msra.mxu0 %v1082
        %1498 = vmatpush.bf16.msra.mxu0 %v1073
        %1499 = vmatpush.bf16.msra.mxu0 %v1064
        %1500 = vmatpush.bf16.msra.mxu0 %v1055
        %1501 = vmatpush.bf16.msra.mxu0 %v1046
        %1502 = vmatpush.bf16.msra.mxu0 %v1037
        %1503 = vmatpush.bf16.msra.mxu0 %v1028
        %1504 = vmatpush.bf16.msra.mxu0 %v1019
        %1505 = vmatmul.bf16.gmra.mxu0 %v434
        %v1506 = vpop.f32.mrf.mxu0
        %v1507 = vadd.f32 %v1494, %v1506
        %v1508 = vpop.f32.mrf.mxu0
        %1509 = vdwg.mxu0
        %1510 = vmatpush.bf16.msra.mxu0 0
        %1511 = vmatpush.bf16.msra.mxu0 0
        %1512 = vmatpush.bf16.msra.mxu0 0
        %1513 = vmatpush.bf16.msra.mxu0 0
        %1514 = vmatpush.bf16.msra.mxu0 0
        %1515 = vmatpush.bf16.msra.mxu0 0
        %1516 = vmatpush.bf16.msra.mxu0 %v1278
        %1517 = vmatpush.bf16.msra.mxu0 %v1091
        %1518 = vmatmul.bf16.gmra.mxu0 %v1259
        %v1519 = vpop.f32.mrf.mxu0
        %v1520 = vadd.f32 %v1507, %v1519
        %v1521 = vpop.f32.mrf.mxu0
        %1522 = vdwg.mxu0
        %1523 = vmatpush.bf16.msra.mxu0 %v1011
        %1524 = vmatpush.bf16.msra.mxu0 %v1002
        %1525 = vmatpush.bf16.msra.mxu0 %v993
        %1526 = vmatpush.bf16.msra.mxu0 %v984
        %1527 = vmatpush.bf16.msra.mxu0 %v975
        %1528 = vmatpush.bf16.msra.mxu0 %v966
        %1529 = vmatpush.bf16.msra.mxu0 %v957
        %1530 = vmatpush.bf16.msra.mxu0 %v948
        %1531 = vmatmul.bf16.gmra.mxu0 %v433
        %v1532 = vpop.f32.mrf.mxu0
        %v1533 = vadd.f32 %v416, %v1532
        %v1534 = vpop.f32.mrf.mxu0
        %1535 = vdwg.mxu0
        %1536 = vmatpush.bf16.msra.mxu0 %v1083
        %1537 = vmatpush.bf16.msra.mxu0 %v1074
        %1538 = vmatpush.bf16.msra.mxu0 %v1065
        %1539 = vmatpush.bf16.msra.mxu0 %v1056
        %1540 = vmatpush.bf16.msra.mxu0 %v1047
        %1541 = vmatpush.bf16.msra.mxu0 %v1038
        %1542 = vmatpush.bf16.msra.mxu0 %v1029
        %1543 = vmatpush.bf16.msra.mxu0 %v1020
        %1544 = vmatmul.bf16.gmra.mxu0 %v434
        %v1545 = vpop.f32.mrf.mxu0
        %v1546 = vadd.f32 %v1533, %v1545
        %v1547 = vpop.f32.mrf.mxu0
        %1548 = vdwg.mxu0
        %1549 = vmatpush.bf16.msra.mxu0 0
        %1550 = vmatpush.bf16.msra.mxu0 0
        %1551 = vmatpush.bf16.msra.mxu0 0
        %1552 = vmatpush.bf16.msra.mxu0 0
        %1553 = vmatpush.bf16.msra.mxu0 0
        %1554 = vmatpush.bf16.msra.mxu0 0
        %1555 = vmatpush.bf16.msra.mxu0 %v1281
        %1556 = vmatpush.bf16.msra.mxu0 %v1092
        %1557 = vmatmul.bf16.gmra.mxu0 %v1259
        %v1558 = vpop.f32.mrf.mxu0
        %v1559 = vadd.f32 %v1546, %v1558
        %v1560 = vpop.f32.mrf.mxu0
        %1561 = vdwg.mxu0
        %1562 = vmatpush.bf16.msra.mxu0 %v1012
        %1563 = vmatpush.bf16.msra.mxu0 %v1003
        %1564 = vmatpush.bf16.msra.mxu0 %v994
        %1565 = vmatpush.bf16.msra.mxu0 %v985
        %1566 = vmatpush.bf16.msra.mxu0 %v976
        %1567 = vmatpush.bf16.msra.mxu0 %v967
        %1568 = vmatpush.bf16.msra.mxu0 %v958
        %1569 = vmatpush.bf16.msra.mxu0 %v949
        %1570 = vmatmul.bf16.gmra.mxu0 %v433
        %v1571 = vpop.f32.mrf.mxu0
        %v1572 = vadd.f32 %v417, %v1571
        %v1573 = vpop.f32.mrf.mxu0
        %1574 = vdwg.mxu0
        %1575 = vmatpush.bf16.msra.mxu0 %v1084
        %1576 = vmatpush.bf16.msra.mxu0 %v1075
        %1577 = vmatpush.bf16.msra.mxu0 %v1066
        %1578 = vmatpush.bf16.msra.mxu0 %v1057
        %1579 = vmatpush.bf16.msra.mxu0 %v1048
        %1580 = vmatpush.bf16.msra.mxu0 %v1039
        %1581 = vmatpush.bf16.msra.mxu0 %v1030
        %1582 = vmatpush.bf16.msra.mxu0 %v1021
        %1583 = vmatmul.bf16.gmra.mxu0 %v434
        %v1584 = vpop.f32.mrf.mxu0
        %v1585 = vadd.f32 %v1572, %v1584
        %v1586 = vpop.f32.mrf.mxu0
        %1587 = vdwg.mxu0
        %1588 = vmatpush.bf16.msra.mxu0 0
        %1589 = vmatpush.bf16.msra.mxu0 0
        %1590 = vmatpush.bf16.msra.mxu0 0
        %1591 = vmatpush.bf16.msra.mxu0 0
        %1592 = vmatpush.bf16.msra.mxu0 0
        %1593 = vmatpush.bf16.msra.mxu0 0
        %1594 = vmatpush.bf16.msra.mxu0 %v1284
        %1595 = vmatpush.bf16.msra.mxu0 %v1093
        %1596 = vmatmul.bf16.gmra.mxu0 %v1259
        %v1597 = vpop.f32.mrf.mxu0
        %v1598 = vadd.f32 %v1585, %v1597
        %v1599 = vpop.f32.mrf.mxu0
        %1600 = vdwg.mxu0
        %1601 = vmatpush.bf16.msra.mxu0 %v1013
        %1602 = vmatpush.bf16.msra.mxu0 %v1004
        %1603 = vmatpush.bf16.msra.mxu0 %v995
        %1604 = vmatpush.bf16.msra.mxu0 %v986
        %1605 = vmatpush.bf16.msra.mxu0 %v977
        %1606 = vmatpush.bf16.msra.mxu0 %v968
        %1607 = vmatpush.bf16.msra.mxu0 %v959
        %1608 = vmatpush.bf16.msra.mxu0 %v950
        %1609 = vmatmul.bf16.gmra.mxu0 %v433
        %v1610 = vpop.f32.mrf.mxu0
        %v1611 = vadd.f32 %v418, %v1610
        %v1612 = vpop.f32.mrf.mxu0
        %1613 = vdwg.mxu0
        %1614 = vmatpush.bf16.msra.mxu0 %v1085
        %1615 = vmatpush.bf16.msra.mxu0 %v1076
        %1616 = vmatpush.bf16.msra.mxu0 %v1067
        %1617 = vmatpush.bf16.msra.mxu0 %v1058
        %1618 = vmatpush.bf16.msra.mxu0 %v1049
        %1619 = vmatpush.bf16.msra.mxu0 %v1040
        %1620 = vmatpush.bf16.msra.mxu0 %v1031
        %1621 = vmatpush.bf16.msra.mxu0 %v1022
        %1622 = vmatmul.bf16.gmra.mxu0 %v434
        %v1623 = vpop.f32.mrf.mxu0
        %v1624 = vadd.f32 %v1611, %v1623
        %v1625 = vpop.f32.mrf.mxu0
        %1626 = vdwg.mxu0
        %1627 = vmatpush.bf16.msra.mxu0 0
        %1628 = vmatpush.bf16.msra.mxu0 0
        %1629 = vmatpush.bf16.msra.mxu0 0
        %1630 = vmatpush.bf16.msra.mxu0 0
        %1631 = vmatpush.bf16.msra.mxu0 0
        %1632 = vmatpush.bf16.msra.mxu0 0
        %1633 = vmatpush.bf16.msra.mxu0 %v1287
        %1634 = vmatpush.bf16.msra.mxu0 %v1094
        %1635 = vmatmul.bf16.gmra.mxu0 %v1259
        %v1636 = vpop.f32.mrf.mxu0
        %v1637 = vadd.f32 %v1624, %v1636
        %v1638 = vpop.f32.mrf.mxu0
        %1639 = vdwg.mxu0
        %v1640 = vmul.f32 %v1325, 0.70710677
        %v1641 = vmul.f32 %v1364, 0.70710677
        %v1642 = vmul.f32 %v1403, 0.70710677
        %v1643 = vmul.f32 %v1442, 0.70710677
        %v1644 = vmul.f32 %v1481, 0.70710677
        %v1645 = vmul.f32 %v1520, 0.70710677
        %v1646 = vmul.f32 %v1559, 0.70710677
        %v1647 = vmul.f32 %v1598, 0.70710677
        %v1648 = vmul.f32 %v1637, 0.70710677
        %v1649 = vand.u32 2147483647, %v1640
        %v1650 = vand.u32 2147483647, %v1641
        %v1651 = vand.u32 2147483647, %v1642
        %v1652 = vand.u32 2147483647, %v1643
        %v1653 = vand.u32 2147483647, %v1644
        %v1654 = vand.u32 2147483647, %v1645
        %v1655 = vand.u32 2147483647, %v1646
        %v1656 = vand.u32 2147483647, %v1647
        %v1657 = vand.u32 2147483647, %v1648
        %v1658 = vmul.f32 %v1649, 0.3275911
        %v1659 = vmul.f32 %v1650, 0.3275911
        %v1660 = vmul.f32 %v1651, 0.3275911
        %v1661 = vmul.f32 %v1652, 0.3275911
        %v1662 = vmul.f32 %v1653, 0.3275911
        %v1663 = vmul.f32 %v1654, 0.3275911
        %v1664 = vmul.f32 %v1655, 0.3275911
        %v1665 = vmul.f32 %v1656, 0.3275911
        %v1666 = vmul.f32 %v1657, 0.3275911
        %v1667 = vadd.f32 %v1658, 1.0
        %v1668 = vadd.f32 %v1659, 1.0
        %v1669 = vadd.f32 %v1660, 1.0
        %v1670 = vadd.f32 %v1661, 1.0
        %v1671 = vadd.f32 %v1662, 1.0
        %v1672 = vadd.f32 %v1663, 1.0
        %v1673 = vadd.f32 %v1664, 1.0
        %v1674 = vadd.f32 %v1665, 1.0
        %v1675 = vadd.f32 %v1666, 1.0
        %v1676 = vrcp.pop %v1667
        %v1677 = vrcp.pop %v1668
        %v1678 = vrcp.pop %v1669
        %v1679 = vrcp.pop %v1670
        %v1680 = vrcp.pop %v1671
        %v1681 = vrcp.pop %v1672
        %v1682 = vrcp.pop %v1673
        %v1683 = vrcp.pop %v1674
        %v1684 = vrcp.pop %v1675
        %v1685 = vmul.f32 %v1676, 1.0614054
        %v1686 = vmul.f32 %v1677, 1.0614054
        %v1687 = vmul.f32 %v1678, 1.0614054
        %v1688 = vmul.f32 %v1679, 1.0614054
        %v1689 = vmul.f32 %v1680, 1.0614054
        %v1690 = vmul.f32 %v1681, 1.0614054
        %v1691 = vmul.f32 %v1682, 1.0614054
        %v1692 = vmul.f32 %v1683, 1.0614054
        %v1693 = vmul.f32 %v1684, 1.0614054
        %v1694 = vadd.f32 %v1685, -1.4531521
        %v1695 = vadd.f32 %v1686, -1.4531521
        %v1696 = vadd.f32 %v1687, -1.4531521
        %v1697 = vadd.f32 %v1688, -1.4531521
        %v1698 = vadd.f32 %v1689, -1.4531521
        %v1699 = vadd.f32 %v1690, -1.4531521
        %v1700 = vadd.f32 %v1691, -1.4531521
        %v1701 = vadd.f32 %v1692, -1.4531521
        %v1702 = vadd.f32 %v1693, -1.4531521
        %v1703 = vmul.f32 %v1676, %v1694
        %v1704 = vmul.f32 %v1677, %v1695
        %v1705 = vmul.f32 %v1678, %v1696
        %v1706 = vmul.f32 %v1679, %v1697
        %v1707 = vmul.f32 %v1680, %v1698
        %v1708 = vmul.f32 %v1681, %v1699
        %v1709 = vmul.f32 %v1682, %v1700
        %v1710 = vmul.f32 %v1683, %v1701
        %v1711 = vmul.f32 %v1684, %v1702
        %v1712 = vadd.f32 %v1703, 1.4214138
        %v1713 = vadd.f32 %v1704, 1.4214138
        %v1714 = vadd.f32 %v1705, 1.4214138
        %v1715 = vadd.f32 %v1706, 1.4214138
        %v1716 = vadd.f32 %v1707, 1.4214138
        %v1717 = vadd.f32 %v1708, 1.4214138
        %v1718 = vadd.f32 %v1709, 1.4214138
        %v1719 = vadd.f32 %v1710, 1.4214138
        %v1720 = vadd.f32 %v1711, 1.4214138
        %v1721 = vmul.f32 %v1676, %v1712
        %v1722 = vmul.f32 %v1677, %v1713
        %v1723 = vmul.f32 %v1678, %v1714
        %v1724 = vmul.f32 %v1679, %v1715
        %v1725 = vmul.f32 %v1680, %v1716
        %v1726 = vmul.f32 %v1681, %v1717
        %v1727 = vmul.f32 %v1682, %v1718
        %v1728 = vmul.f32 %v1683, %v1719
        %v1729 = vmul.f32 %v1684, %v1720
        %v1730 = vadd.f32 %v1721, -0.28449672
        %v1731 = vadd.f32 %v1722, -0.28449672
        %v1732 = vadd.f32 %v1723, -0.28449672
        %v1733 = vadd.f32 %v1724, -0.28449672
        %v1734 = vadd.f32 %v1725, -0.28449672
        %v1735 = vadd.f32 %v1726, -0.28449672
        %v1736 = vadd.f32 %v1727, -0.28449672
        %v1737 = vadd.f32 %v1728, -0.28449672
        %v1738 = vadd.f32 %v1729, -0.28449672
        %v1739 = vmul.f32 %v1676, %v1730
        %v1740 = vmul.f32 %v1677, %v1731
        %v1741 = vmul.f32 %v1678, %v1732
        %v1742 = vmul.f32 %v1679, %v1733
        %v1743 = vmul.f32 %v1680, %v1734
        %v1744 = vmul.f32 %v1681, %v1735
        %v1745 = vmul.f32 %v1682, %v1736
        %v1746 = vmul.f32 %v1683, %v1737
        %v1747 = vmul.f32 %v1684, %v1738
        %v1748 = vadd.f32 %v1739, 0.2548296
        %v1749 = vadd.f32 %v1740, 0.2548296
        %v1750 = vadd.f32 %v1741, 0.2548296
        %v1751 = vadd.f32 %v1742, 0.2548296
        %v1752 = vadd.f32 %v1743, 0.2548296
        %v1753 = vadd.f32 %v1744, 0.2548296
        %v1754 = vadd.f32 %v1745, 0.2548296
        %v1755 = vadd.f32 %v1746, 0.2548296
        %v1756 = vadd.f32 %v1747, 0.2548296
        %v1757 = vmul.f32 %v1676, %v1748
        %v1758 = vmul.f32 %v1677, %v1749
        %v1759 = vmul.f32 %v1678, %v1750
        %v1760 = vmul.f32 %v1679, %v1751
        %v1761 = vmul.f32 %v1680, %v1752
        %v1762 = vmul.f32 %v1681, %v1753
        %v1763 = vmul.f32 %v1682, %v1754
        %v1764 = vmul.f32 %v1683, %v1755
        %v1765 = vmul.f32 %v1684, %v1756
        %v1766 = vsub.f32 0.0, %v1649
        %v1767 = vsub.f32 0.0, %v1650
        %v1768 = vsub.f32 0.0, %v1651
        %v1769 = vsub.f32 0.0, %v1652
        %v1770 = vsub.f32 0.0, %v1653
        %v1771 = vsub.f32 0.0, %v1654
        %v1772 = vsub.f32 0.0, %v1655
        %v1773 = vsub.f32 0.0, %v1656
        %v1774 = vsub.f32 0.0, %v1657
        %v1775 = vmul.f32 %v1766, %v1649
        %v1776 = vmul.f32 %v1767, %v1650
        %v1777 = vmul.f32 %v1768, %v1651
        %v1778 = vmul.f32 %v1769, %v1652
        %v1779 = vmul.f32 %v1770, %v1653
        %v1780 = vmul.f32 %v1771, %v1654
        %v1781 = vmul.f32 %v1772, %v1655
        %v1782 = vmul.f32 %v1773, %v1656
        %v1783 = vmul.f32 %v1774, %v1657
        %v1784 = vmul.f32 %v1775, 1.442695
        %v1785 = vpow.pop %v1784
        %v1786 = vmul.f32 %v1776, 1.442695
        %v1787 = vpow.pop %v1786
        %v1788 = vmul.f32 %v1777, 1.442695
        %v1789 = vpow.pop %v1788
        %v1790 = vmul.f32 %v1778, 1.442695
        %v1791 = vpow.pop %v1790
        %v1792 = vmul.f32 %v1779, 1.442695
        %v1793 = vpow.pop %v1792
        %v1794 = vmul.f32 %v1780, 1.442695
        %v1795 = vpow.pop %v1794
        %v1796 = vmul.f32 %v1781, 1.442695
        %v1797 = vpow.pop %v1796
        %v1798 = vmul.f32 %v1782, 1.442695
        %v1799 = vpow.pop %v1798
        %v1800 = vmul.f32 %v1783, 1.442695
        %v1801 = vpow.pop %v1800
        %v1802 = vmul.f32 %v1757, %v1785
        %v1803 = vmul.f32 %v1758, %v1787
        %v1804 = vmul.f32 %v1759, %v1789
        %v1805 = vmul.f32 %v1760, %v1791
        %v1806 = vmul.f32 %v1761, %v1793
        %v1807 = vmul.f32 %v1762, %v1795
        %v1808 = vmul.f32 %v1763, %v1797
        %v1809 = vmul.f32 %v1764, %v1799
        %v1810 = vmul.f32 %v1765, %v1801
        %v1811 = vsub.f32 1.0, %v1802
        %v1812 = vsub.f32 1.0, %v1803
        %v1813 = vsub.f32 1.0, %v1804
        %v1814 = vsub.f32 1.0, %v1805
        %v1815 = vsub.f32 1.0, %v1806
        %v1816 = vsub.f32 1.0, %v1807
        %v1817 = vsub.f32 1.0, %v1808
        %v1818 = vsub.f32 1.0, %v1809
        %v1819 = vsub.f32 1.0, %v1810
        %vm1820 = vcmp.lt.f32.partialorder %v1640, 0.0
        %vm1821 = vcmp.lt.f32.partialorder %v1641, 0.0
        %vm1822 = vcmp.lt.f32.partialorder %v1642, 0.0
        %vm1823 = vcmp.lt.f32.partialorder %v1643, 0.0
        %vm1824 = vcmp.lt.f32.partialorder %v1644, 0.0
        %vm1825 = vcmp.lt.f32.partialorder %v1645, 0.0
        %vm1826 = vcmp.lt.f32.partialorder %v1646, 0.0
        %vm1827 = vcmp.lt.f32.partialorder %v1647, 0.0
        %vm1828 = vcmp.lt.f32.partialorder %v1648, 0.0
        %v1829 = vsub.f32 0.0, %v1811
        %v1830 = vsub.f32 0.0, %v1812
        %v1831 = vsub.f32 0.0, %v1813
        %v1832 = vsub.f32 0.0, %v1814
        %v1833 = vsub.f32 0.0, %v1815
        %v1834 = vsub.f32 0.0, %v1816
        %v1835 = vsub.f32 0.0, %v1817
        %v1836 = vsub.f32 0.0, %v1818
        %v1837 = vsub.f32 0.0, %v1819
        %v1838 = vsel %vm1820, %v1829, %v1811
        %v1839 = vsel %vm1821, %v1830, %v1812
        %v1840 = vsel %vm1822, %v1831, %v1813
        %v1841 = vsel %vm1823, %v1832, %v1814
        %v1842 = vsel %vm1824, %v1833, %v1815
        %v1843 = vsel %vm1825, %v1834, %v1816
        %v1844 = vsel %vm1826, %v1835, %v1817
        %v1845 = vsel %vm1827, %v1836, %v1818
        %v1846 = vsel %vm1828, %v1837, %v1819
        %v1847 = vmul.f32 %v1325, 0.5
        %v1848 = vmul.f32 %v1364, 0.5
        %v1849 = vmul.f32 %v1403, 0.5
        %v1850 = vmul.f32 %v1442, 0.5
        %v1851 = vmul.f32 %v1481, 0.5
        %v1852 = vmul.f32 %v1520, 0.5
        %v1853 = vmul.f32 %v1559, 0.5
        %v1854 = vmul.f32 %v1598, 0.5
        %v1855 = vmul.f32 %v1637, 0.5
        %v1856 = vadd.f32 %v1838, 1.0
        %v1857 = vadd.f32 %v1839, 1.0
        %v1858 = vadd.f32 %v1840, 1.0
        %v1859 = vadd.f32 %v1841, 1.0
        %v1860 = vadd.f32 %v1842, 1.0
        %v1861 = vadd.f32 %v1843, 1.0
        %v1862 = vadd.f32 %v1844, 1.0
        %v1863 = vadd.f32 %v1845, 1.0
        %v1864 = vadd.f32 %v1846, 1.0
        %v1865 = vmul.f32 %v1847, %v1856
        %v1866 = vmul.f32 %v1848, %v1857
        %v1867 = vmul.f32 %v1849, %v1858
        %v1868 = vmul.f32 %v1850, %v1859
        %v1869 = vmul.f32 %v1851, %v1860
        %v1870 = vmul.f32 %v1852, %v1861
        %v1871 = vmul.f32 %v1853, %v1862
        %v1872 = vmul.f32 %v1854, %v1863
        %v1873 = vmul.f32 %v1855, %v1864
        %v1874 = vpack.c.bf16 %v1865, %v1865
        %v1875 = vpack.c.bf16 %v1866, %v1866
        %v1876 = vpack.c.bf16 %v1867, %v1867
        %v1877 = vpack.c.bf16 %v1868, %v1868
        %v1878 = vpack.c.bf16 %v1869, %v1869
        %v1879 = vpack.c.bf16 %v1870, %v1870
        %v1880 = vpack.c.bf16 %v1871, %v1871
        %v1881 = vpack.c.bf16 %v1872, %v1872
        %v1882 = vpack.c.bf16 %v1873, %v1873
        %v1883 = vld [vmem:[%s3] sm:$0xff]
        %v1884 = vld [vmem:[%s3 + $0x8] sm:$0xf]
        %v1885 = vld [vmem:[%s3 + $0xc] sm:$0xff]
        %v1886 = vld [vmem:[%s3 + $0x14] sm:$0xf]
        %v1887 = vld [vmem:[%s3 + $0x18] sm:$0xff]
        %v1888 = vld [vmem:[%s3 + $0x20] sm:$0xf]
        %v1889 = vld [vmem:[%s3 + $0x24] sm:$0xff]
        %v1890 = vld [vmem:[%s3 + $0x2c] sm:$0xf]
        %v1891 = vld [vmem:[%s3 + $0x30] sm:$0xff]
        %v1892 = vld [vmem:[%s3 + $0x38] sm:$0xf]
        %v1893 = vld [vmem:[%s3 + $0x3c] sm:$0xff]
        %v1894 = vld [vmem:[%s3 + $0x44] sm:$0xf]
        %v1895 = vld [vmem:[%s3 + $0x48] sm:$0xff]
        %v1896 = vld [vmem:[%s3 + $0x50] sm:$0xf]
        %v1897 = vld [vmem:[%s3 + $0x54] sm:$0xff]
        %v1898 = vld [vmem:[%s3 + $0x5c] sm:$0xf]
        %v1899 = vld [vmem:[%s3 + $0x60] sm:$0xff]
        %v1900 = vld [vmem:[%s3 + $0x68] sm:$0xf]
        %v1901 = vld [vmem:[%s3 + $0x6c] sm:$0xff]
        %v1902 = vld [vmem:[%s3 + $0x74] sm:$0xf]
        %v1903 = vld [vmem:[%s3 + $0x78] sm:$0xff]
        %v1904 = vld [vmem:[%s3 + $0x80] sm:$0xf]
        %v1905 = vld [vmem:[%s3 + $0x84] sm:$0xff]
        %v1906 = vld [vmem:[%s3 + $0x8c] sm:$0xf]
        %v1907 = vld [vmem:[%s3 + $0x90] sm:$0xff]
        %v1908 = vld [vmem:[%s3 + $0x98] sm:$0xf]
        %v1909 = vld [vmem:[%s3 + $0x9c] sm:$0xff]
        %v1910 = vld [vmem:[%s3 + $0xa4] sm:$0xf]
        %v1911 = vld [vmem:[%s3 + $0xa8] sm:$0xff]
        %v1912 = vld [vmem:[%s3 + $0xb0] sm:$0xf]
        %v1913 = vld [vmem:[%s3 + $0xb4] sm:$0xff]
        %v1914 = vld [vmem:[%s3 + $0xbc] sm:$0xf]
        %v1915 = vld [vmem:[%s3 + $0xc0] sm:$0xff]
        %v1916 = vld [vmem:[%s3 + $0xc8] sm:$0xf]
        %v1917 = vld [vmem:[%s3 + $0xcc] sm:$0xff]
        %v1918 = vld [vmem:[%s3 + $0xd4] sm:$0xf]
        %v1919 = vld [vmem:[%s3 + $0xd8] sm:$0xff]
        %v1920 = vld [vmem:[%s3 + $0xe0] sm:$0xf]
        %v1921 = vld [vmem:[%s3 + $0xe4] sm:$0xff]
        %v1922 = vld [vmem:[%s3 + $0xec] sm:$0xf]
        %v1923 = vld [vmem:[%s3 + $0xf0] sm:$0xff]
        %v1924 = vld [vmem:[%s3 + $0xf8] sm:$0xf]
        %v1925 = vld [vmem:[%s3 + $0xfc] sm:$0xff]
        %v1926 = vld [vmem:[%s3 + $0x104] sm:$0xf]
        %v1927 = vld [vmem:[%s3 + $0x108] sm:$0xff]
        %v1928 = vld [vmem:[%s3 + $0x110] sm:$0xf]
        %v1929 = vld [vmem:[%s3 + $0x114] sm:$0xff]
        %v1930 = vld [vmem:[%s3 + $0x11c] sm:$0xf]
        %v1931 = vld [vmem:[%s3 + $0x120] sm:$0xff]
        %v1932 = vld [vmem:[%s3 + $0x128] sm:$0xf]
        %v1933 = vld [vmem:[%s3 + $0x12c] sm:$0xff]
        %v1934 = vld [vmem:[%s3 + $0x134] sm:$0xf]
        %v1935 = vld [vmem:[%s3 + $0x138] sm:$0xff]
        %v1936 = vld [vmem:[%s3 + $0x140] sm:$0xf]
        %v1937 = vld [vmem:[%s3 + $0x144] sm:$0xff]
        %v1938 = vld [vmem:[%s3 + $0x14c] sm:$0xf]
        %v1939 = vld [vmem:[%s3 + $0x150] sm:$0xff]
        %v1940 = vld [vmem:[%s3 + $0x158] sm:$0xf]
        %v1941 = vld [vmem:[%s3 + $0x15c] sm:$0xff]
        %v1942 = vld [vmem:[%s3 + $0x164] sm:$0xf]
        %v1943 = vld [vmem:[%s3 + $0x168] sm:$0xff]
        %v1944 = vld [vmem:[%s3 + $0x170] sm:$0xf]
        %v1945 = vld [vmem:[%s3 + $0x174] sm:$0xff]
        %v1946 = vld [vmem:[%s3 + $0x17c] sm:$0xf]
        %v1947 = vld [vmem:[%s3 + $0x180] sm:$0xff]
        %v1948 = vld [vmem:[%s3 + $0x188] sm:$0xf]
        %v1949 = vld [vmem:[%s3 + $0x18c] sm:$0xff]
        %v1950 = vld [vmem:[%s3 + $0x194] sm:$0xf]
        %v1951 = vld [vmem:[%s3 + $0x198] sm:$0xff]
        %v1952 = vld [vmem:[%s3 + $0x1a0] sm:$0xf]
        %v1953 = vld [vmem:[%s3 + $0x1a4] sm:$0xff]
        %v1954 = vld [vmem:[%s3 + $0x1ac] sm:$0xf]
        %v1955 = vld [vmem:[%s3 + $0x1b0] sm:$0xff]
        %v1956 = vld [vmem:[%s3 + $0x1b8] sm:$0xf]
        %v1957 = vld [vmem:[%s3 + $0x1bc] sm:$0xff]
        %v1958 = vld [vmem:[%s3 + $0x1c4] sm:$0xf]
        %v1959 = vld [vmem:[%s3 + $0x1c8] sm:$0xff]
        %v1960 = vld [vmem:[%s3 + $0x1d0] sm:$0xf]
        %v1961 = vld [vmem:[%s3 + $0x1d4] sm:$0xff]
        %v1962 = vld [vmem:[%s3 + $0x1dc] sm:$0xf]
        %v1963 = vld [vmem:[%s3 + $0x1e0] sm:$0xff]
        %v1964 = vld [vmem:[%s3 + $0x1e8] sm:$0xf]
        %v1965 = vld [vmem:[%s3 + $0x1ec] sm:$0xff]
        %v1966 = vld [vmem:[%s3 + $0x1f4] sm:$0xf]
        %v1967 = vld [vmem:[%s3 + $0x1f8] sm:$0xff]
        %v1968 = vld [vmem:[%s3 + $0x200] sm:$0xf]
        %v1969 = vld [vmem:[%s3 + $0x204] sm:$0xff]
        %v1970 = vld [vmem:[%s3 + $0x20c] sm:$0xf]
        %v1971 = vld [vmem:[%s3 + $0x210] sm:$0xff]
        %v1972 = vld [vmem:[%s3 + $0x218] sm:$0xf]
        %v1973 = vld [vmem:[%s3 + $0x21c] sm:$0xff]
        %v1974 = vld [vmem:[%s3 + $0x224] sm:$0xf]
        %v1975 = vld [vmem:[%s3 + $0x228] sm:$0xff]
        %v1976 = vld [vmem:[%s3 + $0x230] sm:$0xf]
        %v1977 = vld [vmem:[%s3 + $0x234] sm:$0xff]
        %v1978 = vld [vmem:[%s3 + $0x23c] sm:$0xf]
        %v1979 = vld [vmem:[%s3 + $0x240] sm:$0xff]
        %v1980 = vld [vmem:[%s3 + $0x248] sm:$0xf]
        %v1981 = vld [vmem:[%s3 + $0x24c] sm:$0xff]
        %v1982 = vld [vmem:[%s3 + $0x254] sm:$0xf]
        %v1983 = vld [vmem:[%s3 + $0x258] sm:$0xff]
        %v1984 = vld [vmem:[%s3 + $0x260] sm:$0xf]
        %v1985 = vld [vmem:[%s3 + $0x264] sm:$0xff]
        %v1986 = vld [vmem:[%s3 + $0x26c] sm:$0xf]
        %v1987 = vld [vmem:[%s3 + $0x270] sm:$0xff]
        %v1988 = vld [vmem:[%s3 + $0x278] sm:$0xf]
        %v1989 = vld [vmem:[%s3 + $0x27c] sm:$0xff]
        %v1990 = vld [vmem:[%s3 + $0x284] sm:$0xf]
        %v1991 = vld [vmem:[%s3 + $0x288] sm:$0xff]
        %v1992 = vld [vmem:[%s3 + $0x290] sm:$0xf]
        %v1993 = vld [vmem:[%s3 + $0x294] sm:$0xff]
        %v1994 = vld [vmem:[%s3 + $0x29c] sm:$0xf]
        %v1995 = vld [vmem:[%s3 + $0x2a0] sm:$0xff]
        %v1996 = vld [vmem:[%s3 + $0x2a8] sm:$0xf]
        %v1997 = vld [vmem:[%s3 + $0x2ac] sm:$0xff]
        %v1998 = vld [vmem:[%s3 + $0x2b4] sm:$0xf]
        %v1999 = vld [vmem:[%s3 + $0x2b8] sm:$0xff]
        %v2000 = vld [vmem:[%s3 + $0x2c0] sm:$0xf]
        %v2001 = vld [vmem:[%s3 + $0x2c4] sm:$0xff]
        %v2002 = vld [vmem:[%s3 + $0x2cc] sm:$0xf]
        %v2003 = vld [vmem:[%s3 + $0x2d0] sm:$0xff]
        %v2004 = vld [vmem:[%s3 + $0x2d8] sm:$0xf]
        %v2005 = vld [vmem:[%s3 + $0x2dc] sm:$0xff]
        %v2006 = vld [vmem:[%s3 + $0x2e4] sm:$0xf]
        %v2007 = vld [vmem:[%s3 + $0x2e8] sm:$0xff]
        %v2008 = vld [vmem:[%s3 + $0x2f0] sm:$0xf]
        %v2009 = vld [vmem:[%s3 + $0x2f4] sm:$0xff]
        %v2010 = vld [vmem:[%s3 + $0x2fc] sm:$0xf]
        %v2011 = vld [vmem:[%s3 + $0x300] sm:$0xff]
        %v2012 = vld [vmem:[%s3 + $0x308] sm:$0xf]
        %v2013 = vld [vmem:[%s3 + $0x30c] sm:$0xff]
        %v2014 = vld [vmem:[%s3 + $0x314] sm:$0xf]
        %v2015 = vld [vmem:[%s3 + $0x318] sm:$0xff]
        %v2016 = vld [vmem:[%s3 + $0x320] sm:$0xf]
        %v2017 = vld [vmem:[%s3 + $0x324] sm:$0xff]
        %v2018 = vld [vmem:[%s3 + $0x32c] sm:$0xf]
        %v2019 = vld [vmem:[%s3 + $0x330] sm:$0xff]
        %v2020 = vld [vmem:[%s3 + $0x338] sm:$0xf]
        %v2021 = vld [vmem:[%s3 + $0x33c] sm:$0xff]
        %v2022 = vld [vmem:[%s3 + $0x344] sm:$0xf]
        %v2023 = vld [vmem:[%s3 + $0x348] sm:$0xff]
        %v2024 = vld [vmem:[%s3 + $0x350] sm:$0xf]
        %v2025 = vld [vmem:[%s3 + $0x354] sm:$0xff]
        %v2026 = vld [vmem:[%s3 + $0x35c] sm:$0xf]
        %v2027 = vld [vmem:[%s3 + $0x360] sm:$0xff]
        %v2028 = vld [vmem:[%s3 + $0x368] sm:$0xf]
        %v2029 = vld [vmem:[%s3 + $0x36c] sm:$0xff]
        %v2030 = vld [vmem:[%s3 + $0x374] sm:$0xf]
        %v2031 = vld [vmem:[%s3 + $0x378] sm:$0xff]
        %v2032 = vld [vmem:[%s3 + $0x380] sm:$0xf]
        %v2033 = vld [vmem:[%s3 + $0x384] sm:$0xff]
        %v2034 = vld [vmem:[%s3 + $0x38c] sm:$0xf]
        %v2035 = vld [vmem:[%s3 + $0x390] sm:$0xff]
        %v2036 = vld [vmem:[%s3 + $0x398] sm:$0xf]
        %v2037 = vld [vmem:[%s3 + $0x39c] sm:$0xff]
        %v2038 = vld [vmem:[%s3 + $0x3a4] sm:$0xf]
        %v2039 = vld [vmem:[%s3 + $0x3a8] sm:$0xff]
        %v2040 = vld [vmem:[%s3 + $0x3b0] sm:$0xf]
        %v2041 = vld [vmem:[%s3 + $0x3b4] sm:$0xff]
        %v2042 = vld [vmem:[%s3 + $0x3bc] sm:$0xf]
        %v2043 = vld [vmem:[%s3 + $0x3c0] sm:$0xff]
        %v2044 = vld [vmem:[%s3 + $0x3c8] sm:$0xf]
        %v2045 = vld [vmem:[%s3 + $0x3cc] sm:$0xff]
        %v2046 = vld [vmem:[%s3 + $0x3d4] sm:$0xf]
        %v2047 = vld [vmem:[%s3 + $0x3d8] sm:$0xff]
        %v2048 = vld [vmem:[%s3 + $0x3e0] sm:$0xf]
        %v2049 = vld [vmem:[%s3 + $0x3e4] sm:$0xff]
        %v2050 = vld [vmem:[%s3 + $0x3ec] sm:$0xf]
        %v2051 = vld [vmem:[%s3 + $0x3f0] sm:$0xff]
        %v2052 = vld [vmem:[%s3 + $0x3f8] sm:$0xf]
        %v2053 = vld [vmem:[%s3 + $0x3fc] sm:$0xff]
        %v2054 = vld [vmem:[%s3 + $0x404] sm:$0xf]
        %v2055 = vld [vmem:[%s3 + $0x408] sm:$0xff]
        %v2056 = vld [vmem:[%s3 + $0x410] sm:$0xf]
        %v2057 = vld [vmem:[%s3 + $0x414] sm:$0xff]
        %v2058 = vld [vmem:[%s3 + $0x41c] sm:$0xf]
        %v2059 = vld [vmem:[%s3 + $0x420] sm:$0xff]
        %v2060 = vld [vmem:[%s3 + $0x428] sm:$0xf]
        %v2061 = vld [vmem:[%s3 + $0x42c] sm:$0xff]
        %v2062 = vld [vmem:[%s3 + $0x434] sm:$0xf]
        %v2063 = vld [vmem:[%s3 + $0x438] sm:$0xff]
        %v2064 = vld [vmem:[%s3 + $0x440] sm:$0xf]
        %v2065 = vld [vmem:[%s3 + $0x444] sm:$0xff]
        %v2066 = vld [vmem:[%s3 + $0x44c] sm:$0xf]
        %v2067 = vld [vmem:[%s3 + $0x450] sm:$0xff]
        %v2068 = vld [vmem:[%s3 + $0x458] sm:$0xf]
        %v2069 = vld [vmem:[%s3 + $0x45c] sm:$0xff]
        %v2070 = vld [vmem:[%s3 + $0x464] sm:$0xf]
        %v2071 = vld [vmem:[%s3 + $0x468] sm:$0xff]
        %v2072 = vld [vmem:[%s3 + $0x470] sm:$0xf]
        %v2073 = vld [vmem:[%s3 + $0x474] sm:$0xff]
        %v2074 = vld [vmem:[%s3 + $0x47c] sm:$0xf]
        %v2075 = vld [vmem:[%s3 + $0x480] sm:$0xff]
        %v2076 = vld [vmem:[%s3 + $0x488] sm:$0xf]
        %v2077 = vld [vmem:[%s3 + $0x48c] sm:$0xff]
        %v2078 = vld [vmem:[%s3 + $0x494] sm:$0xf]
        %v2079 = vld [vmem:[%s3 + $0x498] sm:$0xff]
        %v2080 = vld [vmem:[%s3 + $0x4a0] sm:$0xf]
        %v2081 = vld [vmem:[%s3 + $0x4a4] sm:$0xff]
        %v2082 = vld [vmem:[%s3 + $0x4ac] sm:$0xf]
        %v2083 = vld [vmem:[%s3 + $0x4b0] sm:$0xff]
        %v2084 = vld [vmem:[%s3 + $0x4b8] sm:$0xf]
        %v2085 = vld [vmem:[%s3 + $0x4bc] sm:$0xff]
        %v2086 = vld [vmem:[%s3 + $0x4c4] sm:$0xf]
        %v2087 = vld [vmem:[%s3 + $0x4c8] sm:$0xff]
        %v2088 = vld [vmem:[%s3 + $0x4d0] sm:$0xf]
        %v2089 = vld [vmem:[%s3 + $0x4d4] sm:$0xff]
        %v2090 = vld [vmem:[%s3 + $0x4dc] sm:$0xf]
        %v2091 = vld [vmem:[%s3 + $0x4e0] sm:$0xff]
        %v2092 = vld [vmem:[%s3 + $0x4e8] sm:$0xf]
        %v2093 = vld [vmem:[%s3 + $0x4ec] sm:$0xff]
        %v2094 = vld [vmem:[%s3 + $0x4f4] sm:$0xf]
        %v2095 = vld [vmem:[%s3 + $0x4f8] sm:$0xff]
        %v2096 = vld [vmem:[%s3 + $0x500] sm:$0xf]
        %v2097 = vld [vmem:[%s3 + $0x504] sm:$0xff]
        %v2098 = vld [vmem:[%s3 + $0x50c] sm:$0xf]
        %v2099 = vld [vmem:[%s3 + $0x510] sm:$0xff]
        %v2100 = vld [vmem:[%s3 + $0x518] sm:$0xf]
        %v2101 = vld [vmem:[%s3 + $0x51c] sm:$0xff]
        %v2102 = vld [vmem:[%s3 + $0x524] sm:$0xf]
        %v2103 = vld [vmem:[%s3 + $0x528] sm:$0xff]
        %v2104 = vld [vmem:[%s3 + $0x530] sm:$0xf]
        %v2105 = vld [vmem:[%s3 + $0x534] sm:$0xff]
        %v2106 = vld [vmem:[%s3 + $0x53c] sm:$0xf]
        %v2107 = vld [vmem:[%s3 + $0x540] sm:$0xff]
        %v2108 = vld [vmem:[%s3 + $0x548] sm:$0xf]
        %v2109 = vld [vmem:[%s3 + $0x54c] sm:$0xff]
        %v2110 = vld [vmem:[%s3 + $0x554] sm:$0xf]
        %v2111 = vld [vmem:[%s3 + $0x558] sm:$0xff]
        %v2112 = vld [vmem:[%s3 + $0x560] sm:$0xf]
        %v2113 = vld [vmem:[%s3 + $0x564] sm:$0xff]
        %v2114 = vld [vmem:[%s3 + $0x56c] sm:$0xf]
        %v2115 = vld [vmem:[%s3 + $0x570] sm:$0xff]
        %v2116 = vld [vmem:[%s3 + $0x578] sm:$0xf]
        %v2117 = vld [vmem:[%s3 + $0x57c] sm:$0xff]
        %v2118 = vld [vmem:[%s3 + $0x584] sm:$0xf]
        %v2119 = vld [vmem:[%s3 + $0x588] sm:$0xff]
        %v2120 = vld [vmem:[%s3 + $0x590] sm:$0xf]
        %v2121 = vld [vmem:[%s3 + $0x594] sm:$0xff]
        %v2122 = vld [vmem:[%s3 + $0x59c] sm:$0xf]
        %v2123 = vld [vmem:[%s3 + $0x5a0] sm:$0xff]
        %v2124 = vld [vmem:[%s3 + $0x5a8] sm:$0xf]
        %v2125 = vld [vmem:[%s3 + $0x5ac] sm:$0xff]
        %v2126 = vld [vmem:[%s3 + $0x5b4] sm:$0xf]
        %v2127 = vld [vmem:[%s3 + $0x5b8] sm:$0xff]
        %v2128 = vld [vmem:[%s3 + $0x5c0] sm:$0xf]
        %v2129 = vld [vmem:[%s3 + $0x5c4] sm:$0xff]
        %v2130 = vld [vmem:[%s3 + $0x5cc] sm:$0xf]
        %v2131 = vld [vmem:[%s3 + $0x5d0] sm:$0xff]
        %v2132 = vld [vmem:[%s3 + $0x5d8] sm:$0xf]
        %v2133 = vld [vmem:[%s3 + $0x5dc] sm:$0xff]
        %v2134 = vld [vmem:[%s3 + $0x5e4] sm:$0xf]
        %v2135 = vld [vmem:[%s3 + $0x5e8] sm:$0xff]
        %v2136 = vld [vmem:[%s3 + $0x5f0] sm:$0xf]
        %v2137 = vld [vmem:[%s3 + $0x5f4] sm:$0xff]
        %v2138 = vld [vmem:[%s3 + $0x5fc] sm:$0xf]
        %v2139 = vld [vmem:[%s3 + $0x600] sm:$0xff]
        %v2140 = vld [vmem:[%s3 + $0x608] sm:$0xf]
        %v2141 = vld [vmem:[%s3 + $0x60c] sm:$0xff]
        %v2142 = vld [vmem:[%s3 + $0x614] sm:$0xf]
        %v2143 = vld [vmem:[%s3 + $0x618] sm:$0xff]
        %v2144 = vld [vmem:[%s3 + $0x620] sm:$0xf]
        %v2145 = vld [vmem:[%s3 + $0x624] sm:$0xff]
        %v2146 = vld [vmem:[%s3 + $0x62c] sm:$0xf]
        %v2147 = vld [vmem:[%s3 + $0x630] sm:$0xff]
        %v2148 = vld [vmem:[%s3 + $0x638] sm:$0xf]
        %v2149 = vld [vmem:[%s3 + $0x63c] sm:$0xff]
        %v2150 = vld [vmem:[%s3 + $0x644] sm:$0xf]
        %v2151 = vld [vmem:[%s3 + $0x648] sm:$0xff]
        %v2152 = vld [vmem:[%s3 + $0x650] sm:$0xf]
        %v2153 = vld [vmem:[%s3 + $0x654] sm:$0xff]
        %v2154 = vld [vmem:[%s3 + $0x65c] sm:$0xf]
        %v2155 = vld [vmem:[%s3 + $0x660] sm:$0xff]
        %v2156 = vld [vmem:[%s3 + $0x668] sm:$0xf]
        %v2157 = vld [vmem:[%s3 + $0x66c] sm:$0xff]
        %v2158 = vld [vmem:[%s3 + $0x674] sm:$0xf]
        %v2159 = vld [vmem:[%s3 + $0x678] sm:$0xff]
        %v2160 = vld [vmem:[%s3 + $0x680] sm:$0xf]
        %v2161 = vld [vmem:[%s3 + $0x684] sm:$0xff]
        %v2162 = vld [vmem:[%s3 + $0x68c] sm:$0xf]
        %v2163 = vld [vmem:[%s3 + $0x690] sm:$0xff]
        %v2164 = vld [vmem:[%s3 + $0x698] sm:$0xf]
        %v2165 = vld [vmem:[%s3 + $0x69c] sm:$0xff]
        %v2166 = vld [vmem:[%s3 + $0x6a4] sm:$0xf]
        %v2167 = vld [vmem:[%s4] sm:$0x7]
        %v2169 = vperm.slane %v2167, 0
        %v2170 = vperm.slane %v2167, 1
        %v2171 = vperm.slane %v2167, 2
        %v2459 = vunpack.c.l.b16 %v1883
        %v2460 = vunpack.c.h.b16 %v1883
        %v2461 = vunpack.c.l.b16 %v1884
        %v2462 = vunpack.c.l.b16 %v1885
        %v2463 = vunpack.c.h.b16 %v1885
        %v2464 = vunpack.c.l.b16 %v1886
        %v2465 = vunpack.c.l.b16 %v1887
        %v2466 = vunpack.c.h.b16 %v1887
        %v2467 = vunpack.c.l.b16 %v1888
        %v2468 = vunpack.c.l.b16 %v1889
        %v2469 = vunpack.c.h.b16 %v1889
        %v2470 = vunpack.c.l.b16 %v1890
        %v2471 = vunpack.c.l.b16 %v1891
        %v2472 = vunpack.c.h.b16 %v1891
        %v2473 = vunpack.c.l.b16 %v1892
        %v2474 = vunpack.c.l.b16 %v1893
        %v2475 = vunpack.c.h.b16 %v1893
        %v2476 = vunpack.c.l.b16 %v1894
        %v2477 = vunpack.c.l.b16 %v1895
        %v2478 = vunpack.c.h.b16 %v1895
        %v2479 = vunpack.c.l.b16 %v1896
        %v2480 = vunpack.c.l.b16 %v1897
        %v2481 = vunpack.c.h.b16 %v1897
        %v2482 = vunpack.c.l.b16 %v1898
        %v2483 = vunpack.c.l.b16 %v1899
        %v2484 = vunpack.c.h.b16 %v1899
        %v2485 = vunpack.c.l.b16 %v1900
        %v2486 = vunpack.c.l.b16 %v1901
        %v2487 = vunpack.c.h.b16 %v1901
        %v2488 = vunpack.c.l.b16 %v1902
        %v2489 = vunpack.c.l.b16 %v1903
        %v2490 = vunpack.c.h.b16 %v1903
        %v2491 = vunpack.c.l.b16 %v1904
        %v2492 = vunpack.c.l.b16 %v1905
        %v2493 = vunpack.c.h.b16 %v1905
        %v2494 = vunpack.c.l.b16 %v1906
        %v2495 = vunpack.c.l.b16 %v1907
        %v2496 = vunpack.c.h.b16 %v1907
        %v2497 = vunpack.c.l.b16 %v1908
        %v2498 = vunpack.c.l.b16 %v1909
        %v2499 = vunpack.c.h.b16 %v1909
        %v2500 = vunpack.c.l.b16 %v1910
        %v2501 = vunpack.c.l.b16 %v1911
        %v2502 = vunpack.c.h.b16 %v1911
        %v2503 = vunpack.c.l.b16 %v1912
        %v2504 = vunpack.c.l.b16 %v1913
        %v2505 = vunpack.c.h.b16 %v1913
        %v2506 = vunpack.c.l.b16 %v1914
        %v2507 = vunpack.c.l.b16 %v1915
        %v2508 = vunpack.c.h.b16 %v1915
        %v2509 = vunpack.c.l.b16 %v1916
        %v2510 = vunpack.c.l.b16 %v1917
        %v2511 = vunpack.c.h.b16 %v1917
        %v2512 = vunpack.c.l.b16 %v1918
        %v2513 = vunpack.c.l.b16 %v1919
        %v2514 = vunpack.c.h.b16 %v1919
        %v2515 = vunpack.c.l.b16 %v1920
        %v2516 = vunpack.c.l.b16 %v1921
        %v2517 = vunpack.c.h.b16 %v1921
        %v2518 = vunpack.c.l.b16 %v1922
        %v2519 = vunpack.c.l.b16 %v1923
        %v2520 = vunpack.c.h.b16 %v1923
        %v2521 = vunpack.c.l.b16 %v1924
        %v2522 = vunpack.c.l.b16 %v1925
        %v2523 = vunpack.c.h.b16 %v1925
        %v2524 = vunpack.c.l.b16 %v1926
        %v2525 = vunpack.c.l.b16 %v1927
        %v2526 = vunpack.c.h.b16 %v1927
        %v2527 = vunpack.c.l.b16 %v1928
        %v2528 = vunpack.c.l.b16 %v1929
        %v2529 = vunpack.c.h.b16 %v1929
        %v2530 = vunpack.c.l.b16 %v1930
        %v2531 = vunpack.c.l.b16 %v1931
        %v2532 = vunpack.c.h.b16 %v1931
        %v2533 = vunpack.c.l.b16 %v1932
        %v2534 = vunpack.c.l.b16 %v1933
        %v2535 = vunpack.c.h.b16 %v1933
        %v2536 = vunpack.c.l.b16 %v1934
        %v2537 = vunpack.c.l.b16 %v1935
        %v2538 = vunpack.c.h.b16 %v1935
        %v2539 = vunpack.c.l.b16 %v1936
        %v2540 = vunpack.c.l.b16 %v1937
        %v2541 = vunpack.c.h.b16 %v1937
        %v2542 = vunpack.c.l.b16 %v1938
        %v2543 = vunpack.c.l.b16 %v1939
        %v2544 = vunpack.c.h.b16 %v1939
        %v2545 = vunpack.c.l.b16 %v1940
        %v2546 = vunpack.c.l.b16 %v1941
        %v2547 = vunpack.c.h.b16 %v1941
        %v2548 = vunpack.c.l.b16 %v1942
        %v2549 = vunpack.c.l.b16 %v1943
        %v2550 = vunpack.c.h.b16 %v1943
        %v2551 = vunpack.c.l.b16 %v1944
        %v2552 = vunpack.c.l.b16 %v1945
        %v2553 = vunpack.c.h.b16 %v1945
        %v2554 = vunpack.c.l.b16 %v1946
        %v2555 = vunpack.c.l.b16 %v1947
        %v2556 = vunpack.c.h.b16 %v1947
        %v2557 = vunpack.c.l.b16 %v1948
        %v2558 = vunpack.c.l.b16 %v1949
        %v2559 = vunpack.c.h.b16 %v1949
        %v2560 = vunpack.c.l.b16 %v1950
        %v2561 = vunpack.c.l.b16 %v1951
        %v2562 = vunpack.c.h.b16 %v1951
        %v2563 = vunpack.c.l.b16 %v1952
        %v2564 = vunpack.c.l.b16 %v1953
        %v2565 = vunpack.c.h.b16 %v1953
        %v2566 = vunpack.c.l.b16 %v1954
        %v2567 = vunpack.c.l.b16 %v1955
        %v2568 = vunpack.c.h.b16 %v1955
        %v2569 = vunpack.c.l.b16 %v1956
        %v2570 = vunpack.c.l.b16 %v1957
        %v2571 = vunpack.c.h.b16 %v1957
        %v2572 = vunpack.c.l.b16 %v1958
        %v2573 = vunpack.c.l.b16 %v1959
        %v2574 = vunpack.c.h.b16 %v1959
        %v2575 = vunpack.c.l.b16 %v1960
        %v2576 = vunpack.c.l.b16 %v1961
        %v2577 = vunpack.c.h.b16 %v1961
        %v2578 = vunpack.c.l.b16 %v1962
        %v2579 = vunpack.c.l.b16 %v1963
        %v2580 = vunpack.c.h.b16 %v1963
        %v2581 = vunpack.c.l.b16 %v1964
        %v2582 = vunpack.c.l.b16 %v1965
        %v2583 = vunpack.c.h.b16 %v1965
        %v2584 = vunpack.c.l.b16 %v1966
        %v2585 = vunpack.c.l.b16 %v1967
        %v2586 = vunpack.c.h.b16 %v1967
        %v2587 = vunpack.c.l.b16 %v1968
        %v2588 = vunpack.c.l.b16 %v1969
        %v2589 = vunpack.c.h.b16 %v1969
        %v2590 = vunpack.c.l.b16 %v1970
        %v2591 = vunpack.c.l.b16 %v1971
        %v2592 = vunpack.c.h.b16 %v1971
        %v2593 = vunpack.c.l.b16 %v1972
        %v2594 = vunpack.c.l.b16 %v1973
        %v2595 = vunpack.c.h.b16 %v1973
        %v2596 = vunpack.c.l.b16 %v1974
        %v2597 = vunpack.c.l.b16 %v1975
        %v2598 = vunpack.c.h.b16 %v1975
        %v2599 = vunpack.c.l.b16 %v1976
        %v2600 = vunpack.c.l.b16 %v1977
        %v2601 = vunpack.c.h.b16 %v1977
        %v2602 = vunpack.c.l.b16 %v1978
        %v2603 = vunpack.c.l.b16 %v1979
        %v2604 = vunpack.c.h.b16 %v1979
        %v2605 = vunpack.c.l.b16 %v1980
        %v2606 = vunpack.c.l.b16 %v1981
        %v2607 = vunpack.c.h.b16 %v1981
        %v2608 = vunpack.c.l.b16 %v1982
        %v2609 = vunpack.c.l.b16 %v1983
        %v2610 = vunpack.c.h.b16 %v1983
        %v2611 = vunpack.c.l.b16 %v1984
        %v2612 = vunpack.c.l.b16 %v1985
        %v2613 = vunpack.c.h.b16 %v1985
        %v2614 = vunpack.c.l.b16 %v1986
        %v2615 = vunpack.c.l.b16 %v1987
        %v2616 = vunpack.c.h.b16 %v1987
        %v2617 = vunpack.c.l.b16 %v1988
        %v2618 = vunpack.c.l.b16 %v1989
        %v2619 = vunpack.c.h.b16 %v1989
        %v2620 = vunpack.c.l.b16 %v1990
        %v2621 = vunpack.c.l.b16 %v1991
        %v2622 = vunpack.c.h.b16 %v1991
        %v2623 = vunpack.c.l.b16 %v1992
        %v2624 = vunpack.c.l.b16 %v1993
        %v2625 = vunpack.c.h.b16 %v1993
        %v2626 = vunpack.c.l.b16 %v1994
        %v2627 = vunpack.c.l.b16 %v1995
        %v2628 = vunpack.c.h.b16 %v1995
        %v2629 = vunpack.c.l.b16 %v1996
        %v2630 = vunpack.c.l.b16 %v1997
        %v2631 = vunpack.c.h.b16 %v1997
        %v2632 = vunpack.c.l.b16 %v1998
        %v2633 = vunpack.c.l.b16 %v1999
        %v2634 = vunpack.c.h.b16 %v1999
        %v2635 = vunpack.c.l.b16 %v2000
        %v2636 = vunpack.c.l.b16 %v2001
        %v2637 = vunpack.c.h.b16 %v2001
        %v2638 = vunpack.c.l.b16 %v2002
        %v2639 = vunpack.c.l.b16 %v2003
        %v2640 = vunpack.c.h.b16 %v2003
        %v2641 = vunpack.c.l.b16 %v2004
        %v2642 = vunpack.c.l.b16 %v2005
        %v2643 = vunpack.c.h.b16 %v2005
        %v2644 = vunpack.c.l.b16 %v2006
        %v2645 = vunpack.c.l.b16 %v2007
        %v2646 = vunpack.c.h.b16 %v2007
        %v2647 = vunpack.c.l.b16 %v2008
        %v2648 = vunpack.c.l.b16 %v2009
        %v2649 = vunpack.c.h.b16 %v2009
        %v2650 = vunpack.c.l.b16 %v2010
        %v2651 = vunpack.c.l.b16 %v2011
        %v2652 = vunpack.c.h.b16 %v2011
        %v2653 = vunpack.c.l.b16 %v2012
        %v2654 = vunpack.c.l.b16 %v2013
        %v2655 = vunpack.c.h.b16 %v2013
        %v2656 = vunpack.c.l.b16 %v2014
        %v2657 = vunpack.c.l.b16 %v2015
        %v2658 = vunpack.c.h.b16 %v2015
        %v2659 = vunpack.c.l.b16 %v2016
        %v2660 = vunpack.c.l.b16 %v2017
        %v2661 = vunpack.c.h.b16 %v2017
        %v2662 = vunpack.c.l.b16 %v2018
        %v2663 = vunpack.c.l.b16 %v2019
        %v2664 = vunpack.c.h.b16 %v2019
        %v2665 = vunpack.c.l.b16 %v2020
        %v2666 = vunpack.c.l.b16 %v2021
        %v2667 = vunpack.c.h.b16 %v2021
        %v2668 = vunpack.c.l.b16 %v2022
        %v2669 = vunpack.c.l.b16 %v2023
        %v2670 = vunpack.c.h.b16 %v2023
        %v2671 = vunpack.c.l.b16 %v2024
        %v2672 = vunpack.c.l.b16 %v2025
        %v2673 = vunpack.c.h.b16 %v2025
        %v2674 = vunpack.c.l.b16 %v2026
        %v2675 = vunpack.c.l.b16 %v2027
        %v2676 = vunpack.c.h.b16 %v2027
        %v2677 = vunpack.c.l.b16 %v2028
        %v2678 = vunpack.c.l.b16 %v2029
        %v2679 = vunpack.c.h.b16 %v2029
        %v2680 = vunpack.c.l.b16 %v2030
        %v2681 = vunpack.c.l.b16 %v2031
        %v2682 = vunpack.c.h.b16 %v2031
        %v2683 = vunpack.c.l.b16 %v2032
        %v2684 = vunpack.c.l.b16 %v2033
        %v2685 = vunpack.c.h.b16 %v2033
        %v2686 = vunpack.c.l.b16 %v2034
        %v2687 = vunpack.c.l.b16 %v2035
        %v2688 = vunpack.c.h.b16 %v2035
        %v2689 = vunpack.c.l.b16 %v2036
        %v2690 = vunpack.c.l.b16 %v2037
        %v2691 = vunpack.c.h.b16 %v2037
        %v2692 = vunpack.c.l.b16 %v2038
        %v2693 = vunpack.c.l.b16 %v2039
        %v2694 = vunpack.c.h.b16 %v2039
        %v2695 = vunpack.c.l.b16 %v2040
        %v2696 = vunpack.c.l.b16 %v2041
        %v2697 = vunpack.c.h.b16 %v2041
        %v2698 = vunpack.c.l.b16 %v2042
        %v2699 = vunpack.c.l.b16 %v2043
        %v2700 = vunpack.c.h.b16 %v2043
        %v2701 = vunpack.c.l.b16 %v2044
        %v2702 = vunpack.c.l.b16 %v2045
        %v2703 = vunpack.c.h.b16 %v2045
        %v2704 = vunpack.c.l.b16 %v2046
        %v2705 = vunpack.c.l.b16 %v2047
        %v2706 = vunpack.c.h.b16 %v2047
        %v2707 = vunpack.c.l.b16 %v2048
        %v2708 = vunpack.c.l.b16 %v2049
        %v2709 = vunpack.c.h.b16 %v2049
        %v2710 = vunpack.c.l.b16 %v2050
        %v2711 = vunpack.c.l.b16 %v2051
        %v2712 = vunpack.c.h.b16 %v2051
        %v2713 = vunpack.c.l.b16 %v2052
        %v2714 = vunpack.c.l.b16 %v2053
        %v2715 = vunpack.c.h.b16 %v2053
        %v2716 = vunpack.c.l.b16 %v2054
        %v2717 = vunpack.c.l.b16 %v2055
        %v2718 = vunpack.c.h.b16 %v2055
        %v2719 = vunpack.c.l.b16 %v2056
        %v2720 = vunpack.c.l.b16 %v2057
        %v2721 = vunpack.c.h.b16 %v2057
        %v2722 = vunpack.c.l.b16 %v2058
        %v2723 = vunpack.c.l.b16 %v2059
        %v2724 = vunpack.c.h.b16 %v2059
        %v2725 = vunpack.c.l.b16 %v2060
        %v2726 = vunpack.c.l.b16 %v2061
        %v2727 = vunpack.c.h.b16 %v2061
        %v2728 = vunpack.c.l.b16 %v2062
        %v2729 = vunpack.c.l.b16 %v2063
        %v2730 = vunpack.c.h.b16 %v2063
        %v2731 = vunpack.c.l.b16 %v2064
        %v2732 = vunpack.c.l.b16 %v2065
        %v2733 = vunpack.c.h.b16 %v2065
        %v2734 = vunpack.c.l.b16 %v2066
        %v2735 = vunpack.c.l.b16 %v2067
        %v2736 = vunpack.c.h.b16 %v2067
        %v2737 = vunpack.c.l.b16 %v2068
        %v2738 = vunpack.c.l.b16 %v2069
        %v2739 = vunpack.c.h.b16 %v2069
        %v2740 = vunpack.c.l.b16 %v2070
        %v2741 = vunpack.c.l.b16 %v2071
        %v2742 = vunpack.c.h.b16 %v2071
        %v2743 = vunpack.c.l.b16 %v2072
        %v2744 = vunpack.c.l.b16 %v2073
        %v2745 = vunpack.c.h.b16 %v2073
        %v2746 = vunpack.c.l.b16 %v2074
        %v2747 = vunpack.c.l.b16 %v2075
        %v2748 = vunpack.c.h.b16 %v2075
        %v2749 = vunpack.c.l.b16 %v2076
        %v2750 = vunpack.c.l.b16 %v2077
        %v2751 = vunpack.c.h.b16 %v2077
        %v2752 = vunpack.c.l.b16 %v2078
        %v2753 = vunpack.c.l.b16 %v2079
        %v2754 = vunpack.c.h.b16 %v2079
        %v2755 = vunpack.c.l.b16 %v2080
        %v2756 = vunpack.c.l.b16 %v2081
        %v2757 = vunpack.c.h.b16 %v2081
        %v2758 = vunpack.c.l.b16 %v2082
        %v2759 = vunpack.c.l.b16 %v2083
        %v2760 = vunpack.c.h.b16 %v2083
        %v2761 = vunpack.c.l.b16 %v2084
        %v2762 = vunpack.c.l.b16 %v2085
        %v2763 = vunpack.c.h.b16 %v2085
        %v2764 = vunpack.c.l.b16 %v2086
        %v2765 = vunpack.c.l.b16 %v2087
        %v2766 = vunpack.c.h.b16 %v2087
        %v2767 = vunpack.c.l.b16 %v2088
        %v2768 = vunpack.c.l.b16 %v2089
        %v2769 = vunpack.c.h.b16 %v2089
        %v2770 = vunpack.c.l.b16 %v2090
        %v2771 = vunpack.c.l.b16 %v2091
        %v2772 = vunpack.c.h.b16 %v2091
        %v2773 = vunpack.c.l.b16 %v2092
        %v2774 = vunpack.c.l.b16 %v2093
        %v2775 = vunpack.c.h.b16 %v2093
        %v2776 = vunpack.c.l.b16 %v2094
        %v2777 = vunpack.c.l.b16 %v2095
        %v2778 = vunpack.c.h.b16 %v2095
        %v2779 = vunpack.c.l.b16 %v2096
        %v2780 = vunpack.c.l.b16 %v2097
        %v2781 = vunpack.c.h.b16 %v2097
        %v2782 = vunpack.c.l.b16 %v2098
        %v2783 = vunpack.c.l.b16 %v2099
        %v2784 = vunpack.c.h.b16 %v2099
        %v2785 = vunpack.c.l.b16 %v2100
        %v2786 = vunpack.c.l.b16 %v2101
        %v2787 = vunpack.c.h.b16 %v2101
        %v2788 = vunpack.c.l.b16 %v2102
        %v2789 = vunpack.c.l.b16 %v2103
        %v2790 = vunpack.c.h.b16 %v2103
        %v2791 = vunpack.c.l.b16 %v2104
        %v2792 = vunpack.c.l.b16 %v2105
        %v2793 = vunpack.c.h.b16 %v2105
        %v2794 = vunpack.c.l.b16 %v2106
        %v2795 = vunpack.c.l.b16 %v2107
        %v2796 = vunpack.c.h.b16 %v2107
        %v2797 = vunpack.c.l.b16 %v2108
        %v2798 = vunpack.c.l.b16 %v2109
        %v2799 = vunpack.c.h.b16 %v2109
        %v2800 = vunpack.c.l.b16 %v2110
        %v2801 = vunpack.c.l.b16 %v2111
        %v2802 = vunpack.c.h.b16 %v2111
        %v2803 = vunpack.c.l.b16 %v2112
        %v2804 = vunpack.c.l.b16 %v2113
        %v2805 = vunpack.c.h.b16 %v2113
        %v2806 = vunpack.c.l.b16 %v2114
        %v2807 = vunpack.c.l.b16 %v2115
        %v2808 = vunpack.c.h.b16 %v2115
        %v2809 = vunpack.c.l.b16 %v2116
        %v2810 = vunpack.c.l.b16 %v2117
        %v2811 = vunpack.c.h.b16 %v2117
        %v2812 = vunpack.c.l.b16 %v2118
        %v2813 = vunpack.c.l.b16 %v2119
        %v2814 = vunpack.c.h.b16 %v2119
        %v2815 = vunpack.c.l.b16 %v2120
        %v2816 = vunpack.c.l.b16 %v2121
        %v2817 = vunpack.c.h.b16 %v2121
        %v2818 = vunpack.c.l.b16 %v2122
        %v2819 = vunpack.c.l.b16 %v2123
        %v2820 = vunpack.c.h.b16 %v2123
        %v2821 = vunpack.c.l.b16 %v2124
        %v2822 = vunpack.c.l.b16 %v2125
        %v2823 = vunpack.c.h.b16 %v2125
        %v2824 = vunpack.c.l.b16 %v2126
        %v2825 = vunpack.c.l.b16 %v2127
        %v2826 = vunpack.c.h.b16 %v2127
        %v2827 = vunpack.c.l.b16 %v2128
        %v2828 = vunpack.c.l.b16 %v2129
        %v2829 = vunpack.c.h.b16 %v2129
        %v2830 = vunpack.c.l.b16 %v2130
        %v2831 = vunpack.c.l.b16 %v2131
        %v2832 = vunpack.c.h.b16 %v2131
        %v2833 = vunpack.c.l.b16 %v2132
        %v2834 = vunpack.c.l.b16 %v2133
        %v2835 = vunpack.c.h.b16 %v2133
        %v2836 = vunpack.c.l.b16 %v2134
        %v2837 = vunpack.c.l.b16 %v2135
        %v2838 = vunpack.c.h.b16 %v2135
        %v2839 = vunpack.c.l.b16 %v2136
        %v2840 = vunpack.c.l.b16 %v2137
        %v2841 = vunpack.c.h.b16 %v2137
        %v2842 = vunpack.c.l.b16 %v2138
        %v2843 = vunpack.c.l.b16 %v2139
        %v2844 = vunpack.c.h.b16 %v2139
        %v2845 = vunpack.c.l.b16 %v2140
        %v2846 = vunpack.c.l.b16 %v2141
        %v2847 = vunpack.c.h.b16 %v2141
        %v2848 = vunpack.c.l.b16 %v2142
        %v2849 = vunpack.c.l.b16 %v2143
        %v2850 = vunpack.c.h.b16 %v2143
        %v2851 = vunpack.c.l.b16 %v2144
        %v2852 = vunpack.c.l.b16 %v2145
        %v2853 = vunpack.c.h.b16 %v2145
        %v2854 = vunpack.c.l.b16 %v2146
        %v2855 = vunpack.c.l.b16 %v2147
        %v2856 = vunpack.c.h.b16 %v2147
        %v2857 = vunpack.c.l.b16 %v2148
        %v2858 = vunpack.c.l.b16 %v2149
        %v2859 = vunpack.c.h.b16 %v2149
        %v2860 = vunpack.c.l.b16 %v2150
        %v2861 = vunpack.c.l.b16 %v2151
        %v2862 = vunpack.c.h.b16 %v2151
        %v2863 = vunpack.c.l.b16 %v2152
        %v2864 = vunpack.c.l.b16 %v2153
        %v2865 = vunpack.c.h.b16 %v2153
        %v2866 = vunpack.c.l.b16 %v2154
        %v2867 = vunpack.c.l.b16 %v2155
        %v2868 = vunpack.c.h.b16 %v2155
        %v2869 = vunpack.c.l.b16 %v2156
        %v2870 = vunpack.c.l.b16 %v2157
        %v2871 = vunpack.c.h.b16 %v2157
        %v2872 = vunpack.c.l.b16 %v2158
        %v2873 = vunpack.c.l.b16 %v2159
        %v2874 = vunpack.c.h.b16 %v2159
        %v2875 = vunpack.c.l.b16 %v2160
        %v2876 = vunpack.c.l.b16 %v2161
        %v2877 = vunpack.c.h.b16 %v2161
        %v2878 = vunpack.c.l.b16 %v2162
        %v2879 = vunpack.c.l.b16 %v2163
        %v2880 = vunpack.c.h.b16 %v2163
        %v2881 = vunpack.c.l.b16 %v2164
        %v2882 = vunpack.c.l.b16 %v2165
        %v2883 = vunpack.c.h.b16 %v2165
        %v2884 = vunpack.c.l.b16 %v2166
        %v2885 = vpack.c.b16 %v2462, %v2459
        %v2886 = vpack.c.b16 %v2463, %v2460
        %v2887 = vpack.c.b16 %v2464, %v2461
        %v2888 = vpack.c.b16 %v2468, %v2465
        %v2889 = vpack.c.b16 %v2469, %v2466
        %v2890 = vpack.c.b16 %v2470, %v2467
        %v2891 = vpack.c.b16 %v2474, %v2471
        %v2892 = vpack.c.b16 %v2475, %v2472
        %v2893 = vpack.c.b16 %v2476, %v2473
        %v2894 = vpack.c.b16 %v2480, %v2477
        %v2895 = vpack.c.b16 %v2481, %v2478
        %v2896 = vpack.c.b16 %v2482, %v2479
        %v2897 = vpack.c.b16 %v2486, %v2483
        %v2898 = vpack.c.b16 %v2487, %v2484
        %v2899 = vpack.c.b16 %v2488, %v2485
        %v2900 = vpack.c.b16 %v2492, %v2489
        %v2901 = vpack.c.b16 %v2493, %v2490
        %v2902 = vpack.c.b16 %v2494, %v2491
        %v2903 = vpack.c.b16 %v2498, %v2495
        %v2904 = vpack.c.b16 %v2499, %v2496
        %v2905 = vpack.c.b16 %v2500, %v2497
        %v2906 = vpack.c.b16 %v2504, %v2501
        %v2907 = vpack.c.b16 %v2505, %v2502
        %v2908 = vpack.c.b16 %v2506, %v2503
        %v2909 = vpack.c.b16 %v2510, %v2507
        %v2910 = vpack.c.b16 %v2511, %v2508
        %v2911 = vpack.c.b16 %v2512, %v2509
        %v2912 = vpack.c.b16 %v2516, %v2513
        %v2913 = vpack.c.b16 %v2517, %v2514
        %v2914 = vpack.c.b16 %v2518, %v2515
        %v2915 = vpack.c.b16 %v2522, %v2519
        %v2916 = vpack.c.b16 %v2523, %v2520
        %v2917 = vpack.c.b16 %v2524, %v2521
        %v2918 = vpack.c.b16 %v2528, %v2525
        %v2919 = vpack.c.b16 %v2529, %v2526
        %v2920 = vpack.c.b16 %v2530, %v2527
        %v2921 = vpack.c.b16 %v2534, %v2531
        %v2922 = vpack.c.b16 %v2535, %v2532
        %v2923 = vpack.c.b16 %v2536, %v2533
        %v2924 = vpack.c.b16 %v2540, %v2537
        %v2925 = vpack.c.b16 %v2541, %v2538
        %v2926 = vpack.c.b16 %v2542, %v2539
        %v2927 = vpack.c.b16 %v2546, %v2543
        %v2928 = vpack.c.b16 %v2547, %v2544
        %v2929 = vpack.c.b16 %v2548, %v2545
        %v2930 = vpack.c.b16 %v2552, %v2549
        %v2931 = vpack.c.b16 %v2553, %v2550
        %v2932 = vpack.c.b16 %v2554, %v2551
        %v2933 = vpack.c.b16 %v2558, %v2555
        %v2934 = vpack.c.b16 %v2559, %v2556
        %v2935 = vpack.c.b16 %v2560, %v2557
        %v2936 = vpack.c.b16 %v2564, %v2561
        %v2937 = vpack.c.b16 %v2565, %v2562
        %v2938 = vpack.c.b16 %v2566, %v2563
        %v2939 = vpack.c.b16 %v2570, %v2567
        %v2940 = vpack.c.b16 %v2571, %v2568
        %v2941 = vpack.c.b16 %v2572, %v2569
        %v2942 = vpack.c.b16 %v2576, %v2573
        %v2943 = vpack.c.b16 %v2577, %v2574
        %v2944 = vpack.c.b16 %v2578, %v2575
        %v2945 = vpack.c.b16 %v2582, %v2579
        %v2946 = vpack.c.b16 %v2583, %v2580
        %v2947 = vpack.c.b16 %v2584, %v2581
        %v2948 = vpack.c.b16 %v2588, %v2585
        %v2949 = vpack.c.b16 %v2589, %v2586
        %v2950 = vpack.c.b16 %v2590, %v2587
        %v2951 = vpack.c.b16 %v2594, %v2591
        %v2952 = vpack.c.b16 %v2595, %v2592
        %v2953 = vpack.c.b16 %v2596, %v2593
        %v2954 = vpack.c.b16 %v2600, %v2597
        %v2955 = vpack.c.b16 %v2601, %v2598
        %v2956 = vpack.c.b16 %v2602, %v2599
        %v2957 = vpack.c.b16 %v2606, %v2603
        %v2958 = vpack.c.b16 %v2607, %v2604
        %v2959 = vpack.c.b16 %v2608, %v2605
        %v2960 = vpack.c.b16 %v2612, %v2609
        %v2961 = vpack.c.b16 %v2613, %v2610
        %v2962 = vpack.c.b16 %v2614, %v2611
        %v2963 = vpack.c.b16 %v2618, %v2615
        %v2964 = vpack.c.b16 %v2619, %v2616
        %v2965 = vpack.c.b16 %v2620, %v2617
        %v2966 = vpack.c.b16 %v2624, %v2621
        %v2967 = vpack.c.b16 %v2625, %v2622
        %v2968 = vpack.c.b16 %v2626, %v2623
        %v2969 = vpack.c.b16 %v2630, %v2627
        %v2970 = vpack.c.b16 %v2631, %v2628
        %v2971 = vpack.c.b16 %v2632, %v2629
        %v2972 = vpack.c.b16 %v2636, %v2633
        %v2973 = vpack.c.b16 %v2637, %v2634
        %v2974 = vpack.c.b16 %v2638, %v2635
        %v2975 = vpack.c.b16 %v2642, %v2639
        %v2976 = vpack.c.b16 %v2643, %v2640
        %v2977 = vpack.c.b16 %v2644, %v2641
        %v2978 = vpack.c.b16 %v2648, %v2645
        %v2979 = vpack.c.b16 %v2649, %v2646
        %v2980 = vpack.c.b16 %v2650, %v2647
        %v2981 = vpack.c.b16 %v2654, %v2651
        %v2982 = vpack.c.b16 %v2655, %v2652
        %v2983 = vpack.c.b16 %v2656, %v2653
        %v2984 = vpack.c.b16 %v2660, %v2657
        %v2985 = vpack.c.b16 %v2661, %v2658
        %v2986 = vpack.c.b16 %v2662, %v2659
        %v2987 = vpack.c.b16 %v2666, %v2663
        %v2988 = vpack.c.b16 %v2667, %v2664
        %v2989 = vpack.c.b16 %v2668, %v2665
        %v2990 = vpack.c.b16 %v2672, %v2669
        %v2991 = vpack.c.b16 %v2673, %v2670
        %v2992 = vpack.c.b16 %v2674, %v2671
        %v2993 = vpack.c.b16 %v2678, %v2675
        %v2994 = vpack.c.b16 %v2679, %v2676
        %v2995 = vpack.c.b16 %v2680, %v2677
        %v2996 = vpack.c.b16 %v2684, %v2681
        %v2997 = vpack.c.b16 %v2685, %v2682
        %v2998 = vpack.c.b16 %v2686, %v2683
        %v2999 = vpack.c.b16 %v2690, %v2687
        %v3000 = vpack.c.b16 %v2691, %v2688
        %v3001 = vpack.c.b16 %v2692, %v2689
        %v3002 = vpack.c.b16 %v2696, %v2693
        %v3003 = vpack.c.b16 %v2697, %v2694
        %v3004 = vpack.c.b16 %v2698, %v2695
        %v3005 = vpack.c.b16 %v2702, %v2699
        %v3006 = vpack.c.b16 %v2703, %v2700
        %v3007 = vpack.c.b16 %v2704, %v2701
        %v3008 = vpack.c.b16 %v2708, %v2705
        %v3009 = vpack.c.b16 %v2709, %v2706
        %v3010 = vpack.c.b16 %v2710, %v2707
        %v3011 = vpack.c.b16 %v2714, %v2711
        %v3012 = vpack.c.b16 %v2715, %v2712
        %v3013 = vpack.c.b16 %v2716, %v2713
        %v3014 = vpack.c.b16 %v2720, %v2717
        %v3015 = vpack.c.b16 %v2721, %v2718
        %v3016 = vpack.c.b16 %v2722, %v2719
        %v3017 = vpack.c.b16 %v2726, %v2723
        %v3018 = vpack.c.b16 %v2727, %v2724
        %v3019 = vpack.c.b16 %v2728, %v2725
        %v3020 = vpack.c.b16 %v2732, %v2729
        %v3021 = vpack.c.b16 %v2733, %v2730
        %v3022 = vpack.c.b16 %v2734, %v2731
        %v3023 = vpack.c.b16 %v2738, %v2735
        %v3024 = vpack.c.b16 %v2739, %v2736
        %v3025 = vpack.c.b16 %v2740, %v2737
        %v3026 = vpack.c.b16 %v2744, %v2741
        %v3027 = vpack.c.b16 %v2745, %v2742
        %v3028 = vpack.c.b16 %v2746, %v2743
        %v3029 = vpack.c.b16 %v2750, %v2747
        %v3030 = vpack.c.b16 %v2751, %v2748
        %v3031 = vpack.c.b16 %v2752, %v2749
        %v3032 = vpack.c.b16 %v2756, %v2753
        %v3033 = vpack.c.b16 %v2757, %v2754
        %v3034 = vpack.c.b16 %v2758, %v2755
        %v3035 = vpack.c.b16 %v2762, %v2759
        %v3036 = vpack.c.b16 %v2763, %v2760
        %v3037 = vpack.c.b16 %v2764, %v2761
        %v3038 = vpack.c.b16 %v2768, %v2765
        %v3039 = vpack.c.b16 %v2769, %v2766
        %v3040 = vpack.c.b16 %v2770, %v2767
        %v3041 = vpack.c.b16 %v2774, %v2771
        %v3042 = vpack.c.b16 %v2775, %v2772
        %v3043 = vpack.c.b16 %v2776, %v2773
        %v3044 = vpack.c.b16 %v2780, %v2777
        %v3045 = vpack.c.b16 %v2781, %v2778
        %v3046 = vpack.c.b16 %v2782, %v2779
        %v3047 = vpack.c.b16 %v2786, %v2783
        %v3048 = vpack.c.b16 %v2787, %v2784
        %v3049 = vpack.c.b16 %v2788, %v2785
        %v3050 = vpack.c.b16 %v2792, %v2789
        %v3051 = vpack.c.b16 %v2793, %v2790
        %v3052 = vpack.c.b16 %v2794, %v2791
        %v3053 = vpack.c.b16 %v2798, %v2795
        %v3054 = vpack.c.b16 %v2799, %v2796
        %v3055 = vpack.c.b16 %v2800, %v2797
        %v3056 = vpack.c.b16 %v2804, %v2801
        %v3057 = vpack.c.b16 %v2805, %v2802
        %v3058 = vpack.c.b16 %v2806, %v2803
        %v3059 = vpack.c.b16 %v2810, %v2807
        %v3060 = vpack.c.b16 %v2811, %v2808
        %v3061 = vpack.c.b16 %v2812, %v2809
        %v3062 = vpack.c.b16 %v2816, %v2813
        %v3063 = vpack.c.b16 %v2817, %v2814
        %v3064 = vpack.c.b16 %v2818, %v2815
        %v3065 = vpack.c.b16 %v2822, %v2819
        %v3066 = vpack.c.b16 %v2823, %v2820
        %v3067 = vpack.c.b16 %v2824, %v2821
        %v3068 = vpack.c.b16 %v2828, %v2825
        %v3069 = vpack.c.b16 %v2829, %v2826
        %v3070 = vpack.c.b16 %v2830, %v2827
        %v3071 = vpack.c.b16 %v2834, %v2831
        %v3072 = vpack.c.b16 %v2835, %v2832
        %v3073 = vpack.c.b16 %v2836, %v2833
        %v3074 = vpack.c.b16 %v2840, %v2837
        %v3075 = vpack.c.b16 %v2841, %v2838
        %v3076 = vpack.c.b16 %v2842, %v2839
        %v3077 = vpack.c.b16 %v2846, %v2843
        %v3078 = vpack.c.b16 %v2847, %v2844
        %v3079 = vpack.c.b16 %v2848, %v2845
        %v3080 = vpack.c.b16 %v2852, %v2849
        %v3081 = vpack.c.b16 %v2853, %v2850
        %v3082 = vpack.c.b16 %v2854, %v2851
        %v3083 = vpack.c.b16 %v2858, %v2855
        %v3084 = vpack.c.b16 %v2859, %v2856
        %v3085 = vpack.c.b16 %v2860, %v2857
        %v3086 = vpack.c.b16 %v2864, %v2861
        %v3087 = vpack.c.b16 %v2865, %v2862
        %v3088 = vpack.c.b16 %v2866, %v2863
        %v3089 = vpack.c.b16 %v2870, %v2867
        %v3090 = vpack.c.b16 %v2871, %v2868
        %v3091 = vpack.c.b16 %v2872, %v2869
        %v3092 = vpack.c.b16 %v2876, %v2873
        %v3093 = vpack.c.b16 %v2877, %v2874
        %v3094 = vpack.c.b16 %v2878, %v2875
        %v3095 = vpack.c.b16 %v2882, %v2879
        %v3096 = vpack.c.b16 %v2883, %v2880
        %v3097 = vpack.c.b16 %v2884, %v2881
        %vm3311 = vcmask 916480
        %v3313 = vsel %vm3311, %v1882, 0
        %3315 = vmatpush.bf16.msra.mxu0 %v2906
        %3316 = vmatpush.bf16.msra.mxu0 %v2903
        %3317 = vmatpush.bf16.msra.mxu0 %v2900
        %3318 = vmatpush.bf16.msra.mxu0 %v2897
        %3319 = vmatpush.bf16.msra.mxu0 %v2894
        %3320 = vmatpush.bf16.msra.mxu0 %v2891
        %3321 = vmatpush.bf16.msra.mxu0 %v2888
        %3322 = vmatpush.bf16.msra.mxu0 %v2885
        %3323 = vmatmul.bf16.gmra.mxu0 %v1874
        %v3324 = vpop.f32.mrf.mxu0
        %v3325 = vadd.f32 %v2169, %v3324
        %v3326 = vpop.f32.mrf.mxu0
        %3327 = vdwg.mxu0
        %3328 = vmatpush.bf16.msra.mxu0 %v2930
        %3329 = vmatpush.bf16.msra.mxu0 %v2927
        %3330 = vmatpush.bf16.msra.mxu0 %v2924
        %3331 = vmatpush.bf16.msra.mxu0 %v2921
        %3332 = vmatpush.bf16.msra.mxu0 %v2918
        %3333 = vmatpush.bf16.msra.mxu0 %v2915
        %3334 = vmatpush.bf16.msra.mxu0 %v2912
        %3335 = vmatpush.bf16.msra.mxu0 %v2909
        %3336 = vmatmul.bf16.gmra.mxu0 %v1875
        %v3337 = vpop.f32.mrf.mxu0
        %v3338 = vadd.f32 %v3325, %v3337
        %v3339 = vpop.f32.mrf.mxu0
        %3340 = vdwg.mxu0
        %3341 = vmatpush.bf16.msra.mxu0 %v2954
        %3342 = vmatpush.bf16.msra.mxu0 %v2951
        %3343 = vmatpush.bf16.msra.mxu0 %v2948
        %3344 = vmatpush.bf16.msra.mxu0 %v2945
        %3345 = vmatpush.bf16.msra.mxu0 %v2942
        %3346 = vmatpush.bf16.msra.mxu0 %v2939
        %3347 = vmatpush.bf16.msra.mxu0 %v2936
        %3348 = vmatpush.bf16.msra.mxu0 %v2933
        %3349 = vmatmul.bf16.gmra.mxu0 %v1876
        %v3350 = vpop.f32.mrf.mxu0
        %v3351 = vadd.f32 %v3338, %v3350
        %v3352 = vpop.f32.mrf.mxu0
        %3353 = vdwg.mxu0
        %3354 = vmatpush.bf16.msra.mxu0 %v2978
        %3355 = vmatpush.bf16.msra.mxu0 %v2975
        %3356 = vmatpush.bf16.msra.mxu0 %v2972
        %3357 = vmatpush.bf16.msra.mxu0 %v2969
        %3358 = vmatpush.bf16.msra.mxu0 %v2966
        %3359 = vmatpush.bf16.msra.mxu0 %v2963
        %3360 = vmatpush.bf16.msra.mxu0 %v2960
        %3361 = vmatpush.bf16.msra.mxu0 %v2957
        %3362 = vmatmul.bf16.gmra.mxu0 %v1877
        %v3363 = vpop.f32.mrf.mxu0
        %v3364 = vadd.f32 %v3351, %v3363
        %v3365 = vpop.f32.mrf.mxu0
        %3366 = vdwg.mxu0
        %3367 = vmatpush.bf16.msra.mxu0 %v3002
        %3368 = vmatpush.bf16.msra.mxu0 %v2999
        %3369 = vmatpush.bf16.msra.mxu0 %v2996
        %3370 = vmatpush.bf16.msra.mxu0 %v2993
        %3371 = vmatpush.bf16.msra.mxu0 %v2990
        %3372 = vmatpush.bf16.msra.mxu0 %v2987
        %3373 = vmatpush.bf16.msra.mxu0 %v2984
        %3374 = vmatpush.bf16.msra.mxu0 %v2981
        %3375 = vmatmul.bf16.gmra.mxu0 %v1878
        %v3376 = vpop.f32.mrf.mxu0
        %v3377 = vadd.f32 %v3364, %v3376
        %v3378 = vpop.f32.mrf.mxu0
        %3379 = vdwg.mxu0
        %3380 = vmatpush.bf16.msra.mxu0 %v3026
        %3381 = vmatpush.bf16.msra.mxu0 %v3023
        %3382 = vmatpush.bf16.msra.mxu0 %v3020
        %3383 = vmatpush.bf16.msra.mxu0 %v3017
        %3384 = vmatpush.bf16.msra.mxu0 %v3014
        %3385 = vmatpush.bf16.msra.mxu0 %v3011
        %3386 = vmatpush.bf16.msra.mxu0 %v3008
        %3387 = vmatpush.bf16.msra.mxu0 %v3005
        %3388 = vmatmul.bf16.gmra.mxu0 %v1879
        %v3389 = vpop.f32.mrf.mxu0
        %v3390 = vadd.f32 %v3377, %v3389
        %v3391 = vpop.f32.mrf.mxu0
        %3392 = vdwg.mxu0
        %3393 = vmatpush.bf16.msra.mxu0 %v3050
        %3394 = vmatpush.bf16.msra.mxu0 %v3047
        %3395 = vmatpush.bf16.msra.mxu0 %v3044
        %3396 = vmatpush.bf16.msra.mxu0 %v3041
        %3397 = vmatpush.bf16.msra.mxu0 %v3038
        %3398 = vmatpush.bf16.msra.mxu0 %v3035
        %3399 = vmatpush.bf16.msra.mxu0 %v3032
        %3400 = vmatpush.bf16.msra.mxu0 %v3029
        %3401 = vmatmul.bf16.gmra.mxu0 %v1880
        %v3402 = vpop.f32.mrf.mxu0
        %v3403 = vadd.f32 %v3390, %v3402
        %v3404 = vpop.f32.mrf.mxu0
        %3405 = vdwg.mxu0
        %3406 = vmatpush.bf16.msra.mxu0 %v3074
        %3407 = vmatpush.bf16.msra.mxu0 %v3071
        %3408 = vmatpush.bf16.msra.mxu0 %v3068
        %3409 = vmatpush.bf16.msra.mxu0 %v3065
        %3410 = vmatpush.bf16.msra.mxu0 %v3062
        %3411 = vmatpush.bf16.msra.mxu0 %v3059
        %3412 = vmatpush.bf16.msra.mxu0 %v3056
        %3413 = vmatpush.bf16.msra.mxu0 %v3053
        %3414 = vmatmul.bf16.gmra.mxu0 %v1881
        %v3415 = vpop.f32.mrf.mxu0
        %v3416 = vadd.f32 %v3403, %v3415
        %v3417 = vpop.f32.mrf.mxu0
        %3418 = vdwg.mxu0
        %3419 = vmatpush.bf16.msra.mxu0 0
        %3420 = vmatpush.bf16.msra.mxu0 %v3095
        %3421 = vmatpush.bf16.msra.mxu0 %v3092
        %3422 = vmatpush.bf16.msra.mxu0 %v3089
        %3423 = vmatpush.bf16.msra.mxu0 %v3086
        %3424 = vmatpush.bf16.msra.mxu0 %v3083
        %3425 = vmatpush.bf16.msra.mxu0 %v3080
        %3426 = vmatpush.bf16.msra.mxu0 %v3077
        %3427 = vmatmul.bf16.gmra.mxu0 %v3313
        %v3428 = vpop.f32.mrf.mxu0
        %v3429 = vadd.f32 %v3416, %v3428
        %v3430 = vpop.f32.mrf.mxu0
        %3431 = vdwg.mxu0
        %3432 = vmatpush.bf16.msra.mxu0 %v2907
        %3433 = vmatpush.bf16.msra.mxu0 %v2904
        %3434 = vmatpush.bf16.msra.mxu0 %v2901
        %3435 = vmatpush.bf16.msra.mxu0 %v2898
        %3436 = vmatpush.bf16.msra.mxu0 %v2895
        %3437 = vmatpush.bf16.msra.mxu0 %v2892
        %3438 = vmatpush.bf16.msra.mxu0 %v2889
        %3439 = vmatpush.bf16.msra.mxu0 %v2886
        %3440 = vmatmul.bf16.gmra.mxu0 %v1874
        %v3441 = vpop.f32.mrf.mxu0
        %v3442 = vadd.f32 %v2170, %v3441
        %v3443 = vpop.f32.mrf.mxu0
        %3444 = vdwg.mxu0
        %3445 = vmatpush.bf16.msra.mxu0 %v2931
        %3446 = vmatpush.bf16.msra.mxu0 %v2928
        %3447 = vmatpush.bf16.msra.mxu0 %v2925
        %3448 = vmatpush.bf16.msra.mxu0 %v2922
        %3449 = vmatpush.bf16.msra.mxu0 %v2919
        %3450 = vmatpush.bf16.msra.mxu0 %v2916
        %3451 = vmatpush.bf16.msra.mxu0 %v2913
        %3452 = vmatpush.bf16.msra.mxu0 %v2910
        %3453 = vmatmul.bf16.gmra.mxu0 %v1875
        %v3454 = vpop.f32.mrf.mxu0
        %v3455 = vadd.f32 %v3442, %v3454
        %v3456 = vpop.f32.mrf.mxu0
        %3457 = vdwg.mxu0
        %3458 = vmatpush.bf16.msra.mxu0 %v2955
        %3459 = vmatpush.bf16.msra.mxu0 %v2952
        %3460 = vmatpush.bf16.msra.mxu0 %v2949
        %3461 = vmatpush.bf16.msra.mxu0 %v2946
        %3462 = vmatpush.bf16.msra.mxu0 %v2943
        %3463 = vmatpush.bf16.msra.mxu0 %v2940
        %3464 = vmatpush.bf16.msra.mxu0 %v2937
        %3465 = vmatpush.bf16.msra.mxu0 %v2934
        %3466 = vmatmul.bf16.gmra.mxu0 %v1876
        %v3467 = vpop.f32.mrf.mxu0
        %v3468 = vadd.f32 %v3455, %v3467
        %v3469 = vpop.f32.mrf.mxu0
        %3470 = vdwg.mxu0
        %3471 = vmatpush.bf16.msra.mxu0 %v2979
        %3472 = vmatpush.bf16.msra.mxu0 %v2976
        %3473 = vmatpush.bf16.msra.mxu0 %v2973
        %3474 = vmatpush.bf16.msra.mxu0 %v2970
        %3475 = vmatpush.bf16.msra.mxu0 %v2967
        %3476 = vmatpush.bf16.msra.mxu0 %v2964
        %3477 = vmatpush.bf16.msra.mxu0 %v2961
        %3478 = vmatpush.bf16.msra.mxu0 %v2958
        %3479 = vmatmul.bf16.gmra.mxu0 %v1877
        %v3480 = vpop.f32.mrf.mxu0
        %v3481 = vadd.f32 %v3468, %v3480
        %v3482 = vpop.f32.mrf.mxu0
        %3483 = vdwg.mxu0
        %3484 = vmatpush.bf16.msra.mxu0 %v3003
        %3485 = vmatpush.bf16.msra.mxu0 %v3000
        %3486 = vmatpush.bf16.msra.mxu0 %v2997
        %3487 = vmatpush.bf16.msra.mxu0 %v2994
        %3488 = vmatpush.bf16.msra.mxu0 %v2991
        %3489 = vmatpush.bf16.msra.mxu0 %v2988
        %3490 = vmatpush.bf16.msra.mxu0 %v2985
        %3491 = vmatpush.bf16.msra.mxu0 %v2982
        %3492 = vmatmul.bf16.gmra.mxu0 %v1878
        %v3493 = vpop.f32.mrf.mxu0
        %v3494 = vadd.f32 %v3481, %v3493
        %v3495 = vpop.f32.mrf.mxu0
        %3496 = vdwg.mxu0
        %3497 = vmatpush.bf16.msra.mxu0 %v3027
        %3498 = vmatpush.bf16.msra.mxu0 %v3024
        %3499 = vmatpush.bf16.msra.mxu0 %v3021
        %3500 = vmatpush.bf16.msra.mxu0 %v3018
        %3501 = vmatpush.bf16.msra.mxu0 %v3015
        %3502 = vmatpush.bf16.msra.mxu0 %v3012
        %3503 = vmatpush.bf16.msra.mxu0 %v3009
        %3504 = vmatpush.bf16.msra.mxu0 %v3006
        %3505 = vmatmul.bf16.gmra.mxu0 %v1879
        %v3506 = vpop.f32.mrf.mxu0
        %v3507 = vadd.f32 %v3494, %v3506
        %v3508 = vpop.f32.mrf.mxu0
        %3509 = vdwg.mxu0
        %3510 = vmatpush.bf16.msra.mxu0 %v3051
        %3511 = vmatpush.bf16.msra.mxu0 %v3048
        %3512 = vmatpush.bf16.msra.mxu0 %v3045
        %3513 = vmatpush.bf16.msra.mxu0 %v3042
        %3514 = vmatpush.bf16.msra.mxu0 %v3039
        %3515 = vmatpush.bf16.msra.mxu0 %v3036
        %3516 = vmatpush.bf16.msra.mxu0 %v3033
        %3517 = vmatpush.bf16.msra.mxu0 %v3030
        %3518 = vmatmul.bf16.gmra.mxu0 %v1880
        %v3519 = vpop.f32.mrf.mxu0
        %v3520 = vadd.f32 %v3507, %v3519
        %v3521 = vpop.f32.mrf.mxu0
        %3522 = vdwg.mxu0
        %3523 = vmatpush.bf16.msra.mxu0 %v3075
        %3524 = vmatpush.bf16.msra.mxu0 %v3072
        %3525 = vmatpush.bf16.msra.mxu0 %v3069
        %3526 = vmatpush.bf16.msra.mxu0 %v3066
        %3527 = vmatpush.bf16.msra.mxu0 %v3063
        %3528 = vmatpush.bf16.msra.mxu0 %v3060
        %3529 = vmatpush.bf16.msra.mxu0 %v3057
        %3530 = vmatpush.bf16.msra.mxu0 %v3054
        %3531 = vmatmul.bf16.gmra.mxu0 %v1881
        %v3532 = vpop.f32.mrf.mxu0
        %v3533 = vadd.f32 %v3520, %v3532
        %v3534 = vpop.f32.mrf.mxu0
        %3535 = vdwg.mxu0
        %3536 = vmatpush.bf16.msra.mxu0 0
        %3537 = vmatpush.bf16.msra.mxu0 %v3096
        %3538 = vmatpush.bf16.msra.mxu0 %v3093
        %3539 = vmatpush.bf16.msra.mxu0 %v3090
        %3540 = vmatpush.bf16.msra.mxu0 %v3087
        %3541 = vmatpush.bf16.msra.mxu0 %v3084
        %3542 = vmatpush.bf16.msra.mxu0 %v3081
        %3543 = vmatpush.bf16.msra.mxu0 %v3078
        %3544 = vmatmul.bf16.gmra.mxu0 %v3313
        %v3545 = vpop.f32.mrf.mxu0
        %v3546 = vadd.f32 %v3533, %v3545
        %v3547 = vpop.f32.mrf.mxu0
        %3548 = vdwg.mxu0
        %3549 = vmatpush.bf16.msra.mxu0 %v2908
        %3550 = vmatpush.bf16.msra.mxu0 %v2905
        %3551 = vmatpush.bf16.msra.mxu0 %v2902
        %3552 = vmatpush.bf16.msra.mxu0 %v2899
        %3553 = vmatpush.bf16.msra.mxu0 %v2896
        %3554 = vmatpush.bf16.msra.mxu0 %v2893
        %3555 = vmatpush.bf16.msra.mxu0 %v2890
        %3556 = vmatpush.bf16.msra.mxu0 %v2887
        %3557 = vmatmul.bf16.gmra.mxu0 %v1874
        %v3558 = vpop.f32.mrf.mxu0
        %v3559 = vadd.f32 %v2171, %v3558
        %v3560 = vpop.f32.mrf.mxu0
        %3561 = vdwg.mxu0
        %3562 = vmatpush.bf16.msra.mxu0 %v2932
        %3563 = vmatpush.bf16.msra.mxu0 %v2929
        %3564 = vmatpush.bf16.msra.mxu0 %v2926
        %3565 = vmatpush.bf16.msra.mxu0 %v2923
        %3566 = vmatpush.bf16.msra.mxu0 %v2920
        %3567 = vmatpush.bf16.msra.mxu0 %v2917
        %3568 = vmatpush.bf16.msra.mxu0 %v2914
        %3569 = vmatpush.bf16.msra.mxu0 %v2911
        %3570 = vmatmul.bf16.gmra.mxu0 %v1875
        %v3571 = vpop.f32.mrf.mxu0
        %v3572 = vadd.f32 %v3559, %v3571
        %v3573 = vpop.f32.mrf.mxu0
        %3574 = vdwg.mxu0
        %3575 = vmatpush.bf16.msra.mxu0 %v2956
        %3576 = vmatpush.bf16.msra.mxu0 %v2953
        %3577 = vmatpush.bf16.msra.mxu0 %v2950
        %3578 = vmatpush.bf16.msra.mxu0 %v2947
        %3579 = vmatpush.bf16.msra.mxu0 %v2944
        %3580 = vmatpush.bf16.msra.mxu0 %v2941
        %3581 = vmatpush.bf16.msra.mxu0 %v2938
        %3582 = vmatpush.bf16.msra.mxu0 %v2935
        %3583 = vmatmul.bf16.gmra.mxu0 %v1876
        %v3584 = vpop.f32.mrf.mxu0
        %v3585 = vadd.f32 %v3572, %v3584
        %v3586 = vpop.f32.mrf.mxu0
        %3587 = vdwg.mxu0
        %3588 = vmatpush.bf16.msra.mxu0 %v2980
        %3589 = vmatpush.bf16.msra.mxu0 %v2977
        %3590 = vmatpush.bf16.msra.mxu0 %v2974
        %3591 = vmatpush.bf16.msra.mxu0 %v2971
        %3592 = vmatpush.bf16.msra.mxu0 %v2968
        %3593 = vmatpush.bf16.msra.mxu0 %v2965
        %3594 = vmatpush.bf16.msra.mxu0 %v2962
        %3595 = vmatpush.bf16.msra.mxu0 %v2959
        %3596 = vmatmul.bf16.gmra.mxu0 %v1877
        %v3597 = vpop.f32.mrf.mxu0
        %v3598 = vadd.f32 %v3585, %v3597
        %v3599 = vpop.f32.mrf.mxu0
        %3600 = vdwg.mxu0
        %3601 = vmatpush.bf16.msra.mxu0 %v3004
        %3602 = vmatpush.bf16.msra.mxu0 %v3001
        %3603 = vmatpush.bf16.msra.mxu0 %v2998
        %3604 = vmatpush.bf16.msra.mxu0 %v2995
        %3605 = vmatpush.bf16.msra.mxu0 %v2992
        %3606 = vmatpush.bf16.msra.mxu0 %v2989
        %3607 = vmatpush.bf16.msra.mxu0 %v2986
        %3608 = vmatpush.bf16.msra.mxu0 %v2983
        %3609 = vmatmul.bf16.gmra.mxu0 %v1878
        %v3610 = vpop.f32.mrf.mxu0
        %v3611 = vadd.f32 %v3598, %v3610
        %v3612 = vpop.f32.mrf.mxu0
        %3613 = vdwg.mxu0
        %3614 = vmatpush.bf16.msra.mxu0 %v3028
        %3615 = vmatpush.bf16.msra.mxu0 %v3025
        %3616 = vmatpush.bf16.msra.mxu0 %v3022
        %3617 = vmatpush.bf16.msra.mxu0 %v3019
        %3618 = vmatpush.bf16.msra.mxu0 %v3016
        %3619 = vmatpush.bf16.msra.mxu0 %v3013
        %3620 = vmatpush.bf16.msra.mxu0 %v3010
        %3621 = vmatpush.bf16.msra.mxu0 %v3007
        %3622 = vmatmul.bf16.gmra.mxu0 %v1879
        %v3623 = vpop.f32.mrf.mxu0
        %v3624 = vadd.f32 %v3611, %v3623
        %v3625 = vpop.f32.mrf.mxu0
        %3626 = vdwg.mxu0
        %3627 = vmatpush.bf16.msra.mxu0 %v3052
        %3628 = vmatpush.bf16.msra.mxu0 %v3049
        %3629 = vmatpush.bf16.msra.mxu0 %v3046
        %3630 = vmatpush.bf16.msra.mxu0 %v3043
        %3631 = vmatpush.bf16.msra.mxu0 %v3040
        %3632 = vmatpush.bf16.msra.mxu0 %v3037
        %3633 = vmatpush.bf16.msra.mxu0 %v3034
        %3634 = vmatpush.bf16.msra.mxu0 %v3031
        %3635 = vmatmul.bf16.gmra.mxu0 %v1880
        %v3636 = vpop.f32.mrf.mxu0
        %v3637 = vadd.f32 %v3624, %v3636
        %v3638 = vpop.f32.mrf.mxu0
        %3639 = vdwg.mxu0
        %3640 = vmatpush.bf16.msra.mxu0 %v3076
        %3641 = vmatpush.bf16.msra.mxu0 %v3073
        %3642 = vmatpush.bf16.msra.mxu0 %v3070
        %3643 = vmatpush.bf16.msra.mxu0 %v3067
        %3644 = vmatpush.bf16.msra.mxu0 %v3064
        %3645 = vmatpush.bf16.msra.mxu0 %v3061
        %3646 = vmatpush.bf16.msra.mxu0 %v3058
        %3647 = vmatpush.bf16.msra.mxu0 %v3055
        %3648 = vmatmul.bf16.gmra.mxu0 %v1881
        %v3649 = vpop.f32.mrf.mxu0
        %v3650 = vadd.f32 %v3637, %v3649
        %v3651 = vpop.f32.mrf.mxu0
        %3652 = vdwg.mxu0
        %3653 = vmatpush.bf16.msra.mxu0 0
        %3654 = vmatpush.bf16.msra.mxu0 %v3097
        %3655 = vmatpush.bf16.msra.mxu0 %v3094
        %3656 = vmatpush.bf16.msra.mxu0 %v3091
        %3657 = vmatpush.bf16.msra.mxu0 %v3088
        %3658 = vmatpush.bf16.msra.mxu0 %v3085
        %3659 = vmatpush.bf16.msra.mxu0 %v3082
        %3660 = vmatpush.bf16.msra.mxu0 %v3079
        %3661 = vmatmul.bf16.gmra.mxu0 %v3313
        %v3662 = vpop.f32.mrf.mxu0
        %v3663 = vadd.f32 %v3650, %v3662
        %v3664 = vpop.f32.mrf.mxu0
        %3665 = vdwg.mxu0
        %3666 = vst [vmem:[%s217] sm:$0xff] %v3429
        %3667 = vst [vmem:[%s217 + $0x8] sm:$0xff] %v3546
        %3668 = vst.msk [vmem:[%s217 + $0x10] sm:$0xff] %vm1257, %v3663
        %s3669 = sand.u32 %s137, 1
        %s3670 = scalar_lea.sflag [#allocation3], %s3669
        %s3671 = sand.u32 %s137, 1
        %s3672 = smul.addr %s3671, 24
        %s3673 = scalar_lea.vmem [#allocation2], %s3672
        // Predicated region
        $region41: #{tpu_custom_call.1} parent=39 // pred_check
          %p3674 = pneg %p147
        $region42: #{tpu_custom_call.1} parent=39 // pred_check_branch
          %3676 = sbr.rel (%p3674) target = $region44
        $region43: #{tpu_custom_call.1} parent=39 // pred_region
          %3678 = vsyncadd %s3670, 0
          %s3679 = smul.addr %s19, 3
          %s3680 = smul.addr %s3679, 8
          %s3681 = scalar_lea.hbm %s5, %s3680
          %s3683 = sshll.u32 %s3673, 4
          %s3684 = int_to_ptr.vmem [resolvable:$true] %s3683
          %s3685 = sshll.u32 %s3681, 4
          %s3686 = int_to_ptr.hbm [resolvable:$true] %s3685
          %3688 = dma.vmem_to_hbm [thread:$0]  %s3684, 384, %s3686, %s3670
        $region44: #{tpu_custom_call.1} parent=39 // pred_fallthru
          _
      $region40: #{tpu_custom_call.1} parent=5 // pred_fallthru
        _
      %p3689 = scmp.le.s32.totalorder 2, %s14
      // Predicated region
      $region45: #{tpu_custom_call.1} parent=5 // pred_check
        %p3690 = pneg %p3689
      $region46: #{tpu_custom_call.1} parent=5 // pred_check_branch
        %3692 = sbr.rel (%p3690) target = $region48
      $region47: #{tpu_custom_call.1} parent=5 // pred_region
        %s3693 = ssub.s32 %s14, 2
        // Predicated region
        $region49: #{tpu_custom_call.1} parent=47 // pred_check
          %p3694 = pneg %p153
        $region50: #{tpu_custom_call.1} parent=47 // pred_check_branch
          %3696 = sbr.rel (%p3694) target = $region52
        $region51: #{tpu_custom_call.1} parent=47 // pred_region
          %s3697 = sand.u32 %s138, 1
          %s3698 = scalar_lea.sflag [#allocation3], %s3697
          %s3699 = sand.u32 %s138, 1
          %s3700 = smul.addr %s3699, 24
          %s3701 = scalar_lea.vmem [#allocation2], %s3700
          %3703 = dma.done %s3698, 384
        $region52: #{tpu_custom_call.1} parent=47 // pred_fallthru
          _
      $region48: #{tpu_custom_call.1} parent=5 // pred_fallthru
        _
    $region6: #{tpu_custom_call.1} parent=1 // loop_footer
      %s18 = sadd.s32 1, %s14
    $region7: #{tpu_custom_call.1} parent=1 // loop_footer_branch
      %13 = sbr.rel target = $region3
    $region8: #{tpu_custom_call.1} parent=1 // loop_exit
      _
    %3704 = vsyncpa [#allocation3], 1
    %s3705 = scalar_lea.sflag [#allocation3], 1
    %3706 = vsyncpa %s3705, 1

</llo_original>
